<compile_context>
chip_gen: v5e
topology: v5e:2x2
jax: 0.10.0
libtpu: 0.0.40
codegen_flags: <defaults>
</compile_context>

<pallas_src>
import jax
import jax.numpy as jnp
from jax.experimental import pallas as pl
from jax.experimental.pallas import tpu as pltpu


def _learned_conv_c_kernel(xf_ref, xd_ref, wf_ref, bias_ref, w1_ref, w2_ref,
                           o_ref):
    """One grid step = one batch element.

    xf_ref : (1, Hp*Wq, C) f32  zero-padded input, spatially flattened
             (Hp = H+2, Wq = padded width rounded to a multiple of 8).
    xd_ref : (1, H, W*C)   f32  lane-dense view of the unpadded input.
    wf_ref : (9*C, C)      bf16 conv weights, BN scale folded,
             row order (dy*3 + dx)*C + cin.
    bias_ref: (1, C)       f32  folded conv+BN bias.
    w1_ref : (C, Cr)       bf16 first SE weight, 1/(H*W) folded in.
    w2_ref : (Cr, C)       bf16 second SE weight.
    o_ref  : (1, H, W*C)   f32  lane-dense output.
    """
    _, MP, C = xf_ref.shape
    _, H, WC = xd_ref.shape
    W = WC // C
    Wq = MP // (H + 2)
    M = (H - 1) * Wq + W               # rows covering every interior output

    # --- 3x3 conv: two sublane rolls give the dx = 1, 2 shifts; every tap is
    # then a sublane-aligned static slice of a resident value. ----------------
    f = xf_ref[0]                                          # (MP, C) f32
    shifted = (f,
               pltpu.roll(f, MP - 1, axis=0),              # [p] -> f[p + 1]
               pltpu.roll(f, MP - 2, axis=0))              # [p] -> f[p + 2]

    acc = None
    for dy in range(3):
        base = dy * Wq                                     # multiple of 8
        for dx in range(3):
            tap = dy * 3 + dx
            lhs = shifted[dx][base:base + M, :].astype(jnp.bfloat16)
            part = jnp.dot(lhs, wf_ref[tap * C:(tap + 1) * C, :],
                           preferred_element_type=jnp.float32)
            acc = part if acc is None else acc + part      # (M, C) f32

    # --- folded BN bias + ReLU (scale already folded into the weights) -------
    y = jnp.maximum(acc + bias_ref[...], 0.0)              # (M, C) f32

    # --- gate with x: the center tap is exactly the interior of x and is zero
    # on every non-interior row, so those rows vanish from the pool. ----------
    xg = shifted[1][Wq:Wq + M, :]                          # (M, C) f32
    g = xg * y

    # --- global average pool on the MXU (1/(H*W) is folded into w1) ----------
    pooled = jnp.dot(jnp.ones((1, M), jnp.float32), g,
                     preferred_element_type=jnp.float32)   # (1, C) sum

    # --- squeeze-excite FC: Linear -> ReLU -> Linear -> Sigmoid ---------------
    h = jnp.maximum(
        jnp.dot(pooled.astype(jnp.bfloat16), w1_ref[...],
                preferred_element_type=jnp.float32), 0.0)
    s = jax.nn.sigmoid(
        jnp.dot(h.astype(jnp.bfloat16), w2_ref[...],
                preferred_element_type=jnp.float32))       # (1, C) f32

    # --- lane-dense rescale + unmasked (16, 1024) store -----------------------
    s_tiled = jnp.tile(s, (1, W))                          # (1, W*C)
    o_ref[...] = (xd_ref[...] * s_tiled[None]).astype(o_ref.dtype)


def prepare_params(w_oihw, conv_b, gamma, beta, rmean, rvar, w1_t, w2_t,
                   hw, eps=1e-5):
    """Fold eval-mode BN into conv weights/bias and 1/HW into W1 (once)."""
    C = w_oihw.shape[0]
    scale = gamma / jnp.sqrt(rvar + eps)                   # (C,)
    w_hwio = jnp.transpose(w_oihw, (2, 3, 1, 0))           # (3,3,Cin,Cout)
    wf = (w_hwio * scale).reshape(9 * C, C).astype(jnp.bfloat16)
    bias = ((conv_b - rmean) * scale + beta).reshape(1, C).astype(jnp.float32)
    w1 = (w1_t.T * (1.0 / hw)).astype(jnp.bfloat16)        # (C, Cr)
    w2 = w2_t.T.astype(jnp.bfloat16)                       # (Cr, C)
    return wf, bias, w1, w2


@jax.jit
def learned_conv_c(x_nchw, wf, bias, w1, w2):
    """x_nchw: (B, C, H, W) float32.  Returns (B, C, H, W) float32."""
    B, C, H, W = x_nchw.shape
    Cr = w1.shape[1]

    Hp = H + 2
    Wq = ((W + 2 + 7) // 8) * 8        # sublane-aligned padded width (24)
    MP = Hp * Wq

    # NCHW -> NHWC (TODO(synk): drop if the surrounding model runs in NHWC).
    x = jnp.transpose(x_nchw, (0, 2, 3, 1))
    x_dense = x.reshape(B, H, W * C)                       # free reshape
    x_flat = jnp.pad(
        x, ((0, 0), (1, 1), (1, Wq - W - 1), (0, 0))).reshape(B, MP, C)

    out_dense = pl.pallas_call(
        _learned_conv_c_kernel,
        out_shape=jax.ShapeDtypeStruct((B, H, W * C), x_nchw.dtype),
        grid_spec=pltpu.PrefetchScalarGridSpec(
            num_scalar_prefetch=0,
            grid=(B,),
            in_specs=[
                pl.BlockSpec((1, MP, C), lambda b: (b, 0, 0)),
                pl.BlockSpec((1, H, W * C), lambda b: (b, 0, 0)),
                pl.BlockSpec((9 * C, C), lambda b: (0, 0)),
                pl.BlockSpec((1, C), lambda b: (0, 0)),
                pl.BlockSpec((C, Cr), lambda b: (0, 0)),
                pl.BlockSpec((Cr, C), lambda b: (0, 0)),
            ],
            out_specs=pl.BlockSpec((1, H, W * C), lambda b: (b, 0, 0)),
        ),
        compiler_params=pltpu.CompilerParams(
            dimension_semantics=("parallel",)),
    )(x_flat, x_dense, wf, bias, w1, w2)

    return jnp.transpose(out_dense.reshape(B, H, W, C), (0, 3, 1, 2))


def reference(x_nchw, w_oihw, conv_b, gamma, beta, rmean, rvar, w1_t, w2_t,
              eps=1e-5):
    """Pure-JAX f32 reference of the PyTorch forward (eval-mode BN)."""
    x = jnp.transpose(x_nchw, (0, 2, 3, 1))                      # NHWC
    w_hwio = jnp.transpose(w_oihw, (2, 3, 1, 0))
    y = jax.lax.conv_general_dilated(
        x, w_hwio, window_strides=(1, 1), padding="SAME",
        dimension_numbers=("NHWC", "HWIO", "NHWC")) + conv_b
    y = (y - rmean) / jnp.sqrt(rvar + eps) * gamma + beta
    y = jnp.maximum(y, 0.0)
    g = x * y
    p = jnp.mean(g, axis=(1, 2))                                 # (B, C)
    h = jnp.maximum(p @ w1_t.T, 0.0)
    s = jax.nn.sigmoid(h @ w2_t.T)                               # (B, C)
    out = x * s[:, None, None, :]
    return jnp.transpose(out, (0, 3, 1, 2))                      # NCHW


if __name__ == "__main__":
    B, C, H, W = 2, 64, 16, 16          # inplanes=64
    reduction = 4
    Cr = C // reduction
    eps = 1e-5

    key = jax.random.PRNGKey(0)
    ks = jax.random.split(key, 9)

    # Deterministic synthetic parameters (PyTorch shape conventions).
    w_oihw = jax.random.normal(ks[0], (C, C, 3, 3), jnp.float32) * 0.05
    conv_b = jax.random.normal(ks[1], (C,), jnp.float32) * 0.05
    gamma = 1.0 + 0.1 * jax.random.normal(ks[2], (C,), jnp.float32)
    beta = 0.1 * jax.random.normal(ks[3], (C,), jnp.float32)
    rmean = 0.1 * jax.random.normal(ks[4], (C,), jnp.float32)
    rvar = 0.5 + 0.5 * jnp.abs(jax.random.normal(ks[5], (C,), jnp.float32))
    w1_t = jax.random.normal(ks[6], (Cr, C), jnp.float32) * 0.2   # Linear (out, in)
    w2_t = jax.random.normal(ks[7], (C, Cr), jnp.float32) * 0.2   # Linear (out, in)

    x_nchw = jax.random.normal(ks[8], (B, C, H, W), jnp.float32)

    # One-time parameter folding (BN scale into weights, 1/HW into W1, bf16).
    wf, bias, w1, w2 = prepare_params(w_oihw, conv_b, gamma, beta, rmean,
                                      rvar, w1_t, w2_t, hw=H * W, eps=eps)

    out = learned_conv_c(x_nchw, wf, bias, w1, w2)
    out = jax.block_until_ready(out)

    ref = reference(x_nchw, w_oihw, conv_b, gamma, beta, rmean, rvar,
                    w1_t, w2_t, eps)
    ref = jax.block_until_ready(ref)

    # bf16 MXU operands -> loosened tolerance vs. the f32 reference.
    if not jnp.allclose(out, ref, rtol=2e-2, atol=2e-2):
        max_err = float(jnp.max(jnp.abs(out - ref)))
        raise AssertionError(f"Pallas kernel mismatch vs reference, "
                             f"max abs err = {max_err}")

    print("KERNEL_OK")
</pallas_src>

<mosaic_0001>
module attributes {stable_mosaic.version = 11 : i64} {
  func.func @_learned_conv_c_kernel(%arg0: i32, %arg1: memref<1x432x64xf32, #tpu.memory_space<vmem>>, %arg2: memref<1x16x1024xf32, #tpu.memory_space<vmem>>, %arg3: memref<576x64xbf16, #tpu.memory_space<vmem>>, %arg4: memref<1x64xf32, #tpu.memory_space<vmem>>, %arg5: memref<64x16xbf16, #tpu.memory_space<vmem>>, %arg6: memref<16x64xbf16, #tpu.memory_space<vmem>>, %arg7: memref<1x16x1024xf32, #tpu.memory_space<vmem>>) attributes {dimension_semantics = [#tpu.dimension_semantics<parallel>], iteration_bounds = array<i64: 2>, scalar_prefetch = 0 : i64, scratch_operands = 0 : i64, tpu.core_type = #tpu.core_type<tc>, window_params = [{transform_indices = @transform_0, window_bounds = array<i64: 1, 432, 64>}, {transform_indices = @transform_1, window_bounds = array<i64: 1, 16, 1024>}, {pipeline_mode = #tpu.pipeline_mode<synchronous>, transform_indices = @transform_2, window_bounds = array<i64: 576, 64>}, {pipeline_mode = #tpu.pipeline_mode<synchronous>, transform_indices = @transform_3, window_bounds = array<i64: 1, 64>}, {pipeline_mode = #tpu.pipeline_mode<synchronous>, transform_indices = @transform_4, window_bounds = array<i64: 64, 16>}, {pipeline_mode = #tpu.pipeline_mode<synchronous>, transform_indices = @transform_5, window_bounds = array<i64: 16, 64>}, {transform_indices = @transform_6, window_bounds = array<i64: 1, 16, 1024>}]} {
    %c0 = arith.constant 0 : index
    %c0_0 = arith.constant 0 : index
    %c0_1 = arith.constant 0 : index
    %0 = vector.load %arg1[%c0, %c0_0, %c0_1] : memref<1x432x64xf32, #tpu.memory_space<vmem>>, vector<1x432x64xf32>
    %1 = vector.shape_cast %0 : vector<1x432x64xf32> to vector<432x64xf32>
    %c431_i32 = arith.constant 431 : i32
    %2 = tpu.dynamic_rotate %1 by %c431_i32 dim 0 : vector<432x64xf32>, i32 -> vector<432x64xf32>
    %c430_i32 = arith.constant 430 : i32
    %3 = tpu.dynamic_rotate %1 by %c430_i32 dim 0 : vector<432x64xf32>, i32 -> vector<432x64xf32>
    %4 = vector.extract_strided_slice %1 {offsets = [0, 0], sizes = [376, 64], strides = [1, 1]} : vector<432x64xf32> to vector<376x64xf32>
    %5 = arith.truncf %4 : vector<376x64xf32> to vector<376x64xbf16>
    %c0_2 = arith.constant 0 : index
    %c0_3 = arith.constant 0 : index
    %6 = vector.load %arg3[%c0_2, %c0_3] : memref<576x64xbf16, #tpu.memory_space<vmem>>, vector<64x64xbf16>
    %cst = arith.constant dense<0.000000e+00> : vector<376x64xf32>
    %7 = tpu.matmul %5, %6, %cst {dimension_numbers = #tpu.dot_dimension_numbers<[1], [0], [0], [1], [0, 0, 1, 1], [], []>} : vector<376x64xbf16>, vector<64x64xbf16>, vector<376x64xf32> -> vector<376x64xf32>
    %8 = vector.extract_strided_slice %2 {offsets = [0, 0], sizes = [376, 64], strides = [1, 1]} : vector<432x64xf32> to vector<376x64xf32>
    %9 = arith.truncf %8 : vector<376x64xf32> to vector<376x64xbf16>
    %c64 = arith.constant 64 : index
    %c0_4 = arith.constant 0 : index
    %10 = vector.load %arg3[%c64, %c0_4] : memref<576x64xbf16, #tpu.memory_space<vmem>>, vector<64x64xbf16>
    %cst_5 = arith.constant dense<0.000000e+00> : vector<376x64xf32>
    %11 = tpu.matmul %9, %10, %cst_5 {dimension_numbers = #tpu.dot_dimension_numbers<[1], [0], [0], [1], [0, 0, 1, 1], [], []>} : vector<376x64xbf16>, vector<64x64xbf16>, vector<376x64xf32> -> vector<376x64xf32>
    %12 = arith.addf %7, %11 : vector<376x64xf32>
    %13 = vector.extract_strided_slice %3 {offsets = [0, 0], sizes = [376, 64], strides = [1, 1]} : vector<432x64xf32> to vector<376x64xf32>
    %14 = arith.truncf %13 : vector<376x64xf32> to vector<376x64xbf16>
    %c128 = arith.constant 128 : index
    %c0_6 = arith.constant 0 : index
    %15 = vector.load %arg3[%c128, %c0_6] : memref<576x64xbf16, #tpu.memory_space<vmem>>, vector<64x64xbf16>
    %cst_7 = arith.constant dense<0.000000e+00> : vector<376x64xf32>
    %16 = tpu.matmul %14, %15, %cst_7 {dimension_numbers = #tpu.dot_dimension_numbers<[1], [0], [0], [1], [0, 0, 1, 1], [], []>} : vector<376x64xbf16>, vector<64x64xbf16>, vector<376x64xf32> -> vector<376x64xf32>
    %17 = arith.addf %12, %16 : vector<376x64xf32>
    %18 = vector.extract_strided_slice %1 {offsets = [24, 0], sizes = [376, 64], strides = [1, 1]} : vector<432x64xf32> to vector<376x64xf32>
    %19 = arith.truncf %18 : vector<376x64xf32> to vector<376x64xbf16>
    %c192 = arith.constant 192 : index
    %c0_8 = arith.constant 0 : index
    %20 = vector.load %arg3[%c192, %c0_8] : memref<576x64xbf16, #tpu.memory_space<vmem>>, vector<64x64xbf16>
    %cst_9 = arith.constant dense<0.000000e+00> : vector<376x64xf32>
    %21 = tpu.matmul %19, %20, %cst_9 {dimension_numbers = #tpu.dot_dimension_numbers<[1], [0], [0], [1], [0, 0, 1, 1], [], []>} : vector<376x64xbf16>, vector<64x64xbf16>, vector<376x64xf32> -> vector<376x64xf32>
    %22 = arith.addf %17, %21 : vector<376x64xf32>
    %23 = vector.extract_strided_slice %2 {offsets = [24, 0], sizes = [376, 64], strides = [1, 1]} : vector<432x64xf32> to vector<376x64xf32>
    %24 = arith.truncf %23 : vector<376x64xf32> to vector<376x64xbf16>
    %c256 = arith.constant 256 : index
    %c0_10 = arith.constant 0 : index
    %25 = vector.load %arg3[%c256, %c0_10] : memref<576x64xbf16, #tpu.memory_space<vmem>>, vector<64x64xbf16>
    %cst_11 = arith.constant dense<0.000000e+00> : vector<376x64xf32>
    %26 = tpu.matmul %24, %25, %cst_11 {dimension_numbers = #tpu.dot_dimension_numbers<[1], [0], [0], [1], [0, 0, 1, 1], [], []>} : vector<376x64xbf16>, vector<64x64xbf16>, vector<376x64xf32> -> vector<376x64xf32>
    %27 = arith.addf %22, %26 : vector<376x64xf32>
    %28 = vector.extract_strided_slice %3 {offsets = [24, 0], sizes = [376, 64], strides = [1, 1]} : vector<432x64xf32> to vector<376x64xf32>
    %29 = arith.truncf %28 : vector<376x64xf32> to vector<376x64xbf16>
    %c320 = arith.constant 320 : index
    %c0_12 = arith.constant 0 : index
    %30 = vector.load %arg3[%c320, %c0_12] : memref<576x64xbf16, #tpu.memory_space<vmem>>, vector<64x64xbf16>
    %cst_13 = arith.constant dense<0.000000e+00> : vector<376x64xf32>
    %31 = tpu.matmul %29, %30, %cst_13 {dimension_numbers = #tpu.dot_dimension_numbers<[1], [0], [0], [1], [0, 0, 1, 1], [], []>} : vector<376x64xbf16>, vector<64x64xbf16>, vector<376x64xf32> -> vector<376x64xf32>
    %32 = arith.addf %27, %31 : vector<376x64xf32>
    %33 = vector.extract_strided_slice %1 {offsets = [48, 0], sizes = [376, 64], strides = [1, 1]} : vector<432x64xf32> to vector<376x64xf32>
    %34 = arith.truncf %33 : vector<376x64xf32> to vector<376x64xbf16>
    %c384 = arith.constant 384 : index
    %c0_14 = arith.constant 0 : index
    %35 = vector.load %arg3[%c384, %c0_14] : memref<576x64xbf16, #tpu.memory_space<vmem>>, vector<64x64xbf16>
    %cst_15 = arith.constant dense<0.000000e+00> : vector<376x64xf32>
    %36 = tpu.matmul %34, %35, %cst_15 {dimension_numbers = #tpu.dot_dimension_numbers<[1], [0], [0], [1], [0, 0, 1, 1], [], []>} : vector<376x64xbf16>, vector<64x64xbf16>, vector<376x64xf32> -> vector<376x64xf32>
    %37 = arith.addf %32, %36 : vector<376x64xf32>
    %38 = vector.extract_strided_slice %2 {offsets = [48, 0], sizes = [376, 64], strides = [1, 1]} : vector<432x64xf32> to vector<376x64xf32>
    %39 = arith.truncf %38 : vector<376x64xf32> to vector<376x64xbf16>
    %c448 = arith.constant 448 : index
    %c0_16 = arith.constant 0 : index
    %40 = vector.load %arg3[%c448, %c0_16] : memref<576x64xbf16, #tpu.memory_space<vmem>>, vector<64x64xbf16>
    %cst_17 = arith.constant dense<0.000000e+00> : vector<376x64xf32>
    %41 = tpu.matmul %39, %40, %cst_17 {dimension_numbers = #tpu.dot_dimension_numbers<[1], [0], [0], [1], [0, 0, 1, 1], [], []>} : vector<376x64xbf16>, vector<64x64xbf16>, vector<376x64xf32> -> vector<376x64xf32>
    %42 = arith.addf %37, %41 : vector<376x64xf32>
    %43 = vector.extract_strided_slice %3 {offsets = [48, 0], sizes = [376, 64], strides = [1, 1]} : vector<432x64xf32> to vector<376x64xf32>
    %44 = arith.truncf %43 : vector<376x64xf32> to vector<376x64xbf16>
    %c512 = arith.constant 512 : index
    %c0_18 = arith.constant 0 : index
    %45 = vector.load %arg3[%c512, %c0_18] : memref<576x64xbf16, #tpu.memory_space<vmem>>, vector<64x64xbf16>
    %cst_19 = arith.constant dense<0.000000e+00> : vector<376x64xf32>
    %46 = tpu.matmul %44, %45, %cst_19 {dimension_numbers = #tpu.dot_dimension_numbers<[1], [0], [0], [1], [0, 0, 1, 1], [], []>} : vector<376x64xbf16>, vector<64x64xbf16>, vector<376x64xf32> -> vector<376x64xf32>
    %47 = arith.addf %42, %46 : vector<376x64xf32>
    %c0_20 = arith.constant 0 : index
    %c0_21 = arith.constant 0 : index
    %48 = vector.load %arg4[%c0_20, %c0_21] : memref<1x64xf32, #tpu.memory_space<vmem>>, vector<1x64xf32>
    %49 = vector.broadcast %48 : vector<1x64xf32> to vector<376x64xf32>
    %50 = arith.addf %47, %49 : vector<376x64xf32>
    %cst_22 = arith.constant 0.000000e+00 : f32
    %51 = vector.broadcast %cst_22 : f32 to vector<376x64xf32>
    %52 = arith.maximumf %50, %51 : vector<376x64xf32>
    %53 = vector.extract_strided_slice %2 {offsets = [24, 0], sizes = [376, 64], strides = [1, 1]} : vector<432x64xf32> to vector<376x64xf32>
    %54 = arith.mulf %53, %52 : vector<376x64xf32>
    %cst_23 = arith.constant 1.000000e+00 : f32
    %55 = vector.broadcast %cst_23 : f32 to vector<1x376xf32>
    %cst_24 = arith.constant dense<0.000000e+00> : vector<1x64xf32>
    %56 = tpu.matmul %55, %54, %cst_24 {dimension_numbers = #tpu.dot_dimension_numbers<[1], [0], [0], [1], [0, 0, 1, 1], [], []>} : vector<1x376xf32>, vector<376x64xf32>, vector<1x64xf32> -> vector<1x64xf32>
    %57 = arith.truncf %56 : vector<1x64xf32> to vector<1x64xbf16>
    %c0_25 = arith.constant 0 : index
    %c0_26 = arith.constant 0 : index
    %58 = vector.load %arg5[%c0_25, %c0_26] : memref<64x16xbf16, #tpu.memory_space<vmem>>, vector<64x16xbf16>
    %cst_27 = arith.constant dense<0.000000e+00> : vector<1x16xf32>
    %59 = tpu.matmul %57, %58, %cst_27 {dimension_numbers = #tpu.dot_dimension_numbers<[1], [0], [0], [1], [0, 0, 1, 1], [], []>} : vector<1x64xbf16>, vector<64x16xbf16>, vector<1x16xf32> -> vector<1x16xf32>
    %cst_28 = arith.constant 0.000000e+00 : f32
    %60 = vector.broadcast %cst_28 : f32 to vector<1x16xf32>
    %61 = arith.maximumf %59, %60 : vector<1x16xf32>
    %62 = arith.truncf %61 : vector<1x16xf32> to vector<1x16xbf16>
    %c0_29 = arith.constant 0 : index
    %c0_30 = arith.constant 0 : index
    %63 = vector.load %arg6[%c0_29, %c0_30] : memref<16x64xbf16, #tpu.memory_space<vmem>>, vector<16x64xbf16>
    %cst_31 = arith.constant dense<0.000000e+00> : vector<1x64xf32>
    %64 = tpu.matmul %62, %63, %cst_31 {dimension_numbers = #tpu.dot_dimension_numbers<[1], [0], [0], [1], [0, 0, 1, 1], [], []>} : vector<1x16xbf16>, vector<16x64xbf16>, vector<1x64xf32> -> vector<1x64xf32>
    %65 = arith.negf %64 : vector<1x64xf32>
    %66 = math.exp %65 : vector<1x64xf32>
    %cst_32 = arith.constant 1.000000e+00 : f32
    %67 = vector.broadcast %cst_32 : f32 to vector<1x64xf32>
    %68 = arith.addf %67, %66 : vector<1x64xf32>
    %69 = arith.divf %67, %68 : vector<1x64xf32>
    %70 = tpu.concatenate %69, %69, %69, %69, %69, %69, %69, %69, %69, %69, %69, %69, %69, %69, %69, %69 in 1 : vector<1x64xf32>, vector<1x64xf32>, vector<1x64xf32>, vector<1x64xf32>, vector<1x64xf32>, vector<1x64xf32>, vector<1x64xf32>, vector<1x64xf32>, vector<1x64xf32>, vector<1x64xf32>, vector<1x64xf32>, vector<1x64xf32>, vector<1x64xf32>, vector<1x64xf32>, vector<1x64xf32>, vector<1x64xf32> -> vector<1x1024xf32>
    %c0_33 = arith.constant 0 : index
    %c0_34 = arith.constant 0 : index
    %c0_35 = arith.constant 0 : index
    %71 = vector.load %arg2[%c0_33, %c0_34, %c0_35] : memref<1x16x1024xf32, #tpu.memory_space<vmem>>, vector<1x16x1024xf32>
    %72 = vector.shape_cast %70 : vector<1x1024xf32> to vector<1x1x1024xf32>
    %73 = vector.broadcast %72 : vector<1x1x1024xf32> to vector<1x16x1024xf32>
    %74 = arith.mulf %71, %73 : vector<1x16x1024xf32>
    %c0_36 = arith.constant 0 : index
    %c0_37 = arith.constant 0 : index
    %c0_38 = arith.constant 0 : index
    %75 = vector.load %arg7[%c0_36, %c0_37, %c0_38] : memref<1x16x1024xf32, #tpu.memory_space<vmem>>, vector<1x16x1024xf32>
    tpu.vector_store %arg7[%c0_36, %c0_37, %c0_38], %74 {strides = array<i32>} : memref<1x16x1024xf32, #tpu.memory_space<vmem>>, vector<1x16x1024xf32>,
    return
  }
  func.func @transform_0(%arg0: i32) -> (i32, i32, i32) {
    %c0_i32 = arith.constant 0 : i32
    %c0_i32_0 = arith.constant 0 : i32
    %c0_i32_1 = arith.constant 0 : i32
    return %arg0, %c0_i32, %c0_i32_0 : i32, i32, i32
  }
  func.func @transform_1(%arg0: i32) -> (i32, i32, i32) {
    %c0_i32 = arith.constant 0 : i32
    %c0_i32_0 = arith.constant 0 : i32
    %c0_i32_1 = arith.constant 0 : i32
    return %arg0, %c0_i32, %c0_i32_0 : i32, i32, i32
  }
  func.func @transform_2(%arg0: i32) -> (i32, i32) {
    %c0_i32 = arith.constant 0 : i32
    %c0_i32_0 = arith.constant 0 : i32
    %c0_i32_1 = arith.constant 0 : i32
    return %c0_i32, %c0_i32_0 : i32, i32
  }
  func.func @transform_3(%arg0: i32) -> (i32, i32) {
    %c0_i32 = arith.constant 0 : i32
    %c0_i32_0 = arith.constant 0 : i32
    %c0_i32_1 = arith.constant 0 : i32
    return %c0_i32, %c0_i32_0 : i32, i32
  }
  func.func @transform_4(%arg0: i32) -> (i32, i32) {
    %c0_i32 = arith.constant 0 : i32
    %c0_i32_0 = arith.constant 0 : i32
    %c0_i32_1 = arith.constant 0 : i32
    return %c0_i32, %c0_i32_0 : i32, i32
  }
  func.func @transform_5(%arg0: i32) -> (i32, i32) {
    %c0_i32 = arith.constant 0 : i32
    %c0_i32_0 = arith.constant 0 : i32
    %c0_i32_1 = arith.constant 0 : i32
    return %c0_i32, %c0_i32_0 : i32, i32
  }
  func.func @transform_6(%arg0: i32) -> (i32, i32, i32) {
    %c0_i32 = arith.constant 0 : i32
    %c0_i32_0 = arith.constant 0 : i32
    %c0_i32_1 = arith.constant 0 : i32
    return %arg0, %c0_i32, %c0_i32_0 : i32, i32, i32
  }
}

</mosaic_0001>

<llo_original>
// kernel: learned_conv_c.1
$region0: #{learned_conv_c.1}
  #allocation0 [shape = 'u32[]', space=smem, size = 0x4, offset = 0x4, fixed_abs, tag = 'smem constant byte address 0x4 - core index']
  #allocation1 [shape = 'u32[72,128]{1,0:T(1,128)}', space=vmem, size = 0x9000, scoped, tag = 'internal scratch']
  %s0 = inlined_call_operand.vmem [shape: f32[2,432,64], index: 0, kind: input, shape index: {}]
  %s1 = inlined_call_operand.vmem [shape: f32[2,16,1024], index: 1, kind: input, shape index: {}]
  %s2 = inlined_call_operand.vmem [shape: bf16[576,64], index: 2, kind: input, shape index: {}]
  %s3 = inlined_call_operand.vmem [shape: f32[1,64], index: 3, kind: input, shape index: {}]
  %s4 = inlined_call_operand.vmem [shape: bf16[64,16], index: 4, kind: input, shape index: {}]
  %s5 = inlined_call_operand.vmem [shape: bf16[16,64], index: 5, kind: input, shape index: {}]
  %s6 = inlined_call_operand.vmem [shape: f32[2,16,1024], index: 6, kind: output, shape index: {}]
  %s7 = sld [smem:[#allocation0]]
  $region57: #{learned_conv_c.1} parent=0
    _
  %s9 = ssub.s32 1, %s7
  %s10 = scalar_select 0, %s9, %s7
  loop: start=0, step=1, limit=4
  $region2: #{learned_conv_c.1} parent=0 // loop_pre_header
    _
  $region3: #{learned_conv_c.1} parent=0 // loop_header
    %s12 = sphi 0, %s16
    %p13 = scmp.ge.s32.totalorder %s12, 4
    %s22 = sphi 0, %s24
    %s25 = sphi 0, %s22
    %s26 = sphi 0, %s25
    %s42 = sphi 0, %s26
    %s48 = sphi 0, %s50
    %s51 = sphi 0, %s48
    %s52 = sphi 0, %s51
    %s68 = sphi 0, %s52
    %s72 = sphi 0, %s72
    %s74 = sphi 0, %s72
    %s75 = sphi 0, %s74
    %s89 = sphi 0, %s75
    %s93 = sphi 0, %s93
    %s95 = sphi 0, %s93
    %s96 = sphi 0, %s95
    %s110 = sphi 0, %s96
    %s114 = sphi 0, %s114
    %s116 = sphi 0, %s114
    %s117 = sphi 0, %s116
    %s131 = sphi 0, %s117
    %s135 = sphi 0, %s135
    %s137 = sphi 0, %s135
    %s138 = sphi 0, %s137
    %s152 = sphi 0, %s138
    %s158 = sphi 0, %s160
    %s161 = sphi 0, %s158
    %s162 = sphi 0, %s161
    %s178 = sphi 0, %s162
  $region4: #{learned_conv_c.1} parent=0 // loop_header_branch
    %15 = sbr.rel (%p13) target = $region8
  $region5: #{learned_conv_c.1} parent=0 // loop_body
    %s17 = ssub.s32 %s12, 1
    %s18 = ssub.s32 %s12, 2
    %s19 = sadd.s32 %s12, 1
    %s20 = ssub.s32 %s12, %s19
    %p21 = scmp.eq.s32.totalorder %s20, 0
    %s23 = sadd.s32 %s22, 1
    %s24 = scalar_select %p21, %s22, %s23
    %p27 = pneg %p21
    %p28 = scmp.eq.s32.totalorder %s12, 1
    %p29 = por %p27, %p28
    %p30 = scmp.ne.s32.totalorder %s22, %s25
    %p31 = scmp.eq.s32.totalorder %s12, 0
    %p32 = por %p30, %p31
    %p33 = scmp.ne.s32.totalorder %s22, %s25
    %p34 = scmp.eq.s32.totalorder %s17, 1
    %p35 = por %p33, %p34
    %p36 = scmp.ne.s32.totalorder %s25, %s26
    %p37 = scmp.eq.s32.totalorder %s17, 0
    %p38 = por %p36, %p37
    %p39 = scmp.ne.s32.totalorder %s25, %s26
    %p40 = scmp.eq.s32.totalorder %s18, 1
    %p41 = por %p39, %p40
    %p43 = scmp.ne.s32.totalorder %s26, %s42
    %p44 = scmp.eq.s32.totalorder %s18, 0
    %p45 = por %p43, %p44
    %s46 = ssub.s32 %s12, %s19
    %p47 = scmp.eq.s32.totalorder %s46, 0
    %s49 = sadd.s32 %s48, 1
    %s50 = scalar_select %p47, %s48, %s49
    %p53 = pneg %p47
    %p54 = scmp.eq.s32.totalorder %s12, 1
    %p55 = por %p53, %p54
    %p56 = scmp.ne.s32.totalorder %s48, %s51
    %p57 = scmp.eq.s32.totalorder %s12, 0
    %p58 = por %p56, %p57
    %p59 = scmp.ne.s32.totalorder %s48, %s51
    %p60 = scmp.eq.s32.totalorder %s17, 1
    %p61 = por %p59, %p60
    %p62 = scmp.ne.s32.totalorder %s51, %s52
    %p63 = scmp.eq.s32.totalorder %s17, 0
    %p64 = por %p62, %p63
    %p65 = scmp.ne.s32.totalorder %s51, %s52
    %p66 = scmp.eq.s32.totalorder %s18, 1
    %p67 = por %p65, %p66
    %p69 = scmp.ne.s32.totalorder %s52, %s68
    %p70 = scmp.eq.s32.totalorder %s18, 0
    %p71 = por %p69, %p70
    %s73 = sadd.s32 %s72, 1
    %p76 = scmp.eq.s32.totalorder %s12, 1
    %p77 = scmp.ne.s32.totalorder %s72, %s74
    %p78 = scmp.eq.s32.totalorder %s12, 0
    %p79 = por %p77, %p78
    %p80 = scmp.ne.s32.totalorder %s72, %s74
    %p81 = scmp.eq.s32.totalorder %s17, 1
    %p82 = por %p80, %p81
    %p83 = scmp.ne.s32.totalorder %s74, %s75
    %p84 = scmp.eq.s32.totalorder %s17, 0
    %p85 = por %p83, %p84
    %p86 = scmp.ne.s32.totalorder %s74, %s75
    %p87 = scmp.eq.s32.totalorder %s18, 1
    %p88 = por %p86, %p87
    %p90 = scmp.ne.s32.totalorder %s75, %s89
    %p91 = scmp.eq.s32.totalorder %s18, 0
    %p92 = por %p90, %p91
    %s94 = sadd.s32 %s93, 1
    %p97 = scmp.eq.s32.totalorder %s12, 1
    %p98 = scmp.ne.s32.totalorder %s93, %s95
    %p99 = scmp.eq.s32.totalorder %s12, 0
    %p100 = por %p98, %p99
    %p101 = scmp.ne.s32.totalorder %s93, %s95
    %p102 = scmp.eq.s32.totalorder %s17, 1
    %p103 = por %p101, %p102
    %p104 = scmp.ne.s32.totalorder %s95, %s96
    %p105 = scmp.eq.s32.totalorder %s17, 0
    %p106 = por %p104, %p105
    %p107 = scmp.ne.s32.totalorder %s95, %s96
    %p108 = scmp.eq.s32.totalorder %s18, 1
    %p109 = por %p107, %p108
    %p111 = scmp.ne.s32.totalorder %s96, %s110
    %p112 = scmp.eq.s32.totalorder %s18, 0
    %p113 = por %p111, %p112
    %s115 = sadd.s32 %s114, 1
    %p118 = scmp.eq.s32.totalorder %s12, 1
    %p119 = scmp.ne.s32.totalorder %s114, %s116
    %p120 = scmp.eq.s32.totalorder %s12, 0
    %p121 = por %p119, %p120
    %p122 = scmp.ne.s32.totalorder %s114, %s116
    %p123 = scmp.eq.s32.totalorder %s17, 1
    %p124 = por %p122, %p123
    %p125 = scmp.ne.s32.totalorder %s116, %s117
    %p126 = scmp.eq.s32.totalorder %s17, 0
    %p127 = por %p125, %p126
    %p128 = scmp.ne.s32.totalorder %s116, %s117
    %p129 = scmp.eq.s32.totalorder %s18, 1
    %p130 = por %p128, %p129
    %p132 = scmp.ne.s32.totalorder %s117, %s131
    %p133 = scmp.eq.s32.totalorder %s18, 0
    %p134 = por %p132, %p133
    %s136 = sadd.s32 %s135, 1
    %p139 = scmp.eq.s32.totalorder %s12, 1
    %p140 = scmp.ne.s32.totalorder %s135, %s137
    %p141 = scmp.eq.s32.totalorder %s12, 0
    %p142 = por %p140, %p141
    %p143 = scmp.ne.s32.totalorder %s135, %s137
    %p144 = scmp.eq.s32.totalorder %s17, 1
    %p145 = por %p143, %p144
    %p146 = scmp.ne.s32.totalorder %s137, %s138
    %p147 = scmp.eq.s32.totalorder %s17, 0
    %p148 = por %p146, %p147
    %p149 = scmp.ne.s32.totalorder %s137, %s138
    %p150 = scmp.eq.s32.totalorder %s18, 1
    %p151 = por %p149, %p150
    %p153 = scmp.ne.s32.totalorder %s138, %s152
    %p154 = scmp.eq.s32.totalorder %s18, 0
    %p155 = por %p153, %p154
    %s156 = ssub.s32 %s12, %s19
    %p157 = scmp.eq.s32.totalorder %s156, 0
    %s159 = sadd.s32 %s158, 1
    %s160 = scalar_select %p157, %s158, %s159
    %p163 = pneg %p157
    %p164 = scmp.eq.s32.totalorder %s12, 1
    %p165 = por %p163, %p164
    %p166 = scmp.ne.s32.totalorder %s158, %s161
    %p167 = scmp.eq.s32.totalorder %s12, 0
    %p168 = por %p166, %p167
    %p169 = scmp.ne.s32.totalorder %s158, %s161
    %p170 = scmp.eq.s32.totalorder %s17, 1
    %p171 = por %p169, %p170
    %p172 = scmp.ne.s32.totalorder %s161, %s162
    %p173 = scmp.eq.s32.totalorder %s17, 0
    %p174 = por %p172, %p173
    %p175 = scmp.ne.s32.totalorder %s161, %s162
    %p176 = scmp.eq.s32.totalorder %s18, 1
    %p177 = por %p175, %p176
    %p179 = scmp.ne.s32.totalorder %s162, %s178
    %p180 = scmp.eq.s32.totalorder %s18, 0
    %p181 = por %p179, %p180
    %p182 = scmp.le.s32.totalorder 1, %s12
    %p183 = scmp.lt.s32.totalorder %s12, 3
    %p184 = pnand %p182, %p183
    %p185 = pneg %p184
    // Predicated region
    $region9: #{learned_conv_c.1} parent=5 // pred_check
      _
    $region10: #{learned_conv_c.1} parent=5 // pred_check_branch
      %187 = sbr.rel (%p184) target = $region12
    $region11: #{learned_conv_c.1} parent=5 // pred_region
      %s188 = ssub.s32 %s12, 1
      // Predicated region
      $region13: #{learned_conv_c.1} parent=11 // pred_check
        %p189 = pneg %p85
      $region14: #{learned_conv_c.1} parent=11 // pred_check_branch
        %191 = sbr.rel (%p189) target = $region16
      $region15: #{learned_conv_c.1} parent=11 // pred_region
        _
      $region16: #{learned_conv_c.1} parent=11 // pred_fallthru
        _
      // Predicated region
      $region17: #{learned_conv_c.1} parent=11 // pred_check
        %p192 = pneg %p106
      $region18: #{learned_conv_c.1} parent=11 // pred_check_branch
        %194 = sbr.rel (%p192) target = $region20
      $region19: #{learned_conv_c.1} parent=11 // pred_region
        _
      $region20: #{learned_conv_c.1} parent=11 // pred_fallthru
        _
      // Predicated region
      $region21: #{learned_conv_c.1} parent=11 // pred_check
        %p195 = pneg %p127
      $region22: #{learned_conv_c.1} parent=11 // pred_check_branch
        %197 = sbr.rel (%p195) target = $region24
      $region23: #{learned_conv_c.1} parent=11 // pred_region
        _
      $region24: #{learned_conv_c.1} parent=11 // pred_fallthru
        _
      // Predicated region
      $region25: #{learned_conv_c.1} parent=11 // pred_check
        %p198 = pneg %p148
      $region26: #{learned_conv_c.1} parent=11 // pred_check_branch
        %200 = sbr.rel (%p198) target = $region28
      $region27: #{learned_conv_c.1} parent=11 // pred_region
        _
      $region28: #{learned_conv_c.1} parent=11 // pred_fallthru
        _
    $region12: #{learned_conv_c.1} parent=5 // pred_fallthru
      _
    %p201 = scmp.lt.s32.totalorder %s12, 2
    // Predicated region
    $region29: #{learned_conv_c.1} parent=5 // pred_check
      %p202 = pneg %p201
    $region30: #{learned_conv_c.1} parent=5 // pred_check_branch
      %204 = sbr.rel (%p202) target = $region32
    $region31: #{learned_conv_c.1} parent=5 // pred_region
      // Predicated region
      $region33: #{learned_conv_c.1} parent=31 // pred_check
        %p205 = pneg %p32
      $region34: #{learned_conv_c.1} parent=31 // pred_check_branch
        %207 = sbr.rel (%p205) target = $region36
      $region35: #{learned_conv_c.1} parent=31 // pred_region
        %p208 = scmp.lt.s32.totalorder %s12, 1
        %s209 = scalar_select %p208, %s12, 1
        %s210 = smul.addr %s209, 54
        %s211 = smul.addr %s210, 8
        %s212 = scalar_lea.vmem %s0, %s211
      $region36: #{learned_conv_c.1} parent=31 // pred_fallthru
        _
      // Predicated region
      $region37: #{learned_conv_c.1} parent=31 // pred_check
        %p213 = pneg %p58
      $region38: #{learned_conv_c.1} parent=31 // pred_check_branch
        %215 = sbr.rel (%p213) target = $region40
      $region39: #{learned_conv_c.1} parent=31 // pred_region
        %p216 = scmp.lt.s32.totalorder %s12, 1
        %s217 = scalar_select %p216, %s12, 1
        %s218 = smul.addr %s217, 16
        %s219 = smul.addr %s218, 8
        %s220 = scalar_lea.vmem %s1, %s219
      $region40: #{learned_conv_c.1} parent=31 // pred_fallthru
        _
    $region32: #{learned_conv_c.1} parent=5 // pred_fallthru
      _
    %p221 = scmp.le.s32.totalorder 1, %s12
    %p222 = scmp.lt.s32.totalorder %s12, 3
    %p223 = pnand %p221, %p222
    %p224 = pneg %p223
    // Predicated region
    $region41: #{learned_conv_c.1} parent=5 // pred_check
      _
    $region42: #{learned_conv_c.1} parent=5 // pred_check_branch
      %226 = sbr.rel (%p223) target = $region44
    $region43: #{learned_conv_c.1} parent=5 // pred_region
      %s227 = ssub.s32 %s12, 1
      %p228 = scmp.lt.s32.totalorder %s17, 1
      %s229 = scalar_select %p228, %s17, 1
      %s230 = smul.addr %s229, 54
      %s231 = smul.addr %s230, 8
      %s232 = scalar_lea.vmem %s0, %s231
      %p233 = pneg %p38
      %p234 = pneg %p35
      %p235 = scmp.lt.s32.totalorder %s17, 1
      %s236 = scalar_select %p235, %s17, 1
      %s237 = smul.addr %s236, 16
      %s238 = smul.addr %s237, 8
      %s239 = scalar_lea.vmem %s1, %s238
      %p240 = pneg %p64
      %p241 = pneg %p61
      %p242 = pneg %p85
      %p243 = pneg %p82
      %p244 = pneg %p106
      %p245 = pneg %p103
      %p246 = pneg %p127
      %p247 = pneg %p124
      %p248 = pneg %p148
      %p249 = pneg %p145
      %p250 = pneg %p174
      %p251 = pneg %p171
      %p252 = scmp.lt.s32.totalorder %s17, 1
      %s253 = scalar_select %p252, %s17, 1
      %s254 = smul.addr %s253, 16
      %s255 = smul.addr %s254, 8
      %s256 = scalar_lea.vmem %s6, %s255
      %p257 = scmp.lt.s32.totalorder %s17, 1
      %s258 = scalar_select %p257, %s17, 1
      %s259 = smul.addr %s258, 54
      %s260 = smul.addr %s259, 8
      %s261 = scalar_lea.vmem %s0, %s260
      %p262 = scmp.lt.s32.totalorder %s17, 1
      %s263 = scalar_select %p262, %s17, 1
      %s264 = smul.addr %s263, 16
      %s265 = smul.addr %s264, 8
      %s266 = scalar_lea.vmem %s1, %s265
      %p267 = scmp.lt.s32.totalorder %s17, 1
      %s268 = scalar_select %p267, %s17, 1
      %s269 = smul.addr %s268, 16
      %s270 = smul.addr %s269, 8
      %s271 = scalar_lea.vmem %s6, %s270
      %v273 = vld [vmem:[%s261] sm:$0xff]
      %v274 = vld [vmem:[%s261 + $0x8] sm:$0xff]
      %v275 = vld [vmem:[%s261 + $0x10] sm:$0xff]
      %v276 = vld [vmem:[%s261 + $0x18] sm:$0xff]
      %v277 = vld [vmem:[%s261 + $0x20] sm:$0xff]
      %v278 = vld [vmem:[%s261 + $0x28] sm:$0xff]
      %v279 = vld [vmem:[%s261 + $0x30] sm:$0xff]
      %v280 = vld [vmem:[%s261 + $0x38] sm:$0xff]
      %v281 = vld [vmem:[%s261 + $0x40] sm:$0xff]
      %v282 = vld [vmem:[%s261 + $0x48] sm:$0xff]
      %v283 = vld [vmem:[%s261 + $0x50] sm:$0xff]
      %v284 = vld [vmem:[%s261 + $0x58] sm:$0xff]
      %v285 = vld [vmem:[%s261 + $0x60] sm:$0xff]
      %v286 = vld [vmem:[%s261 + $0x68] sm:$0xff]
      %v287 = vld [vmem:[%s261 + $0x70] sm:$0xff]
      %v288 = vld [vmem:[%s261 + $0x78] sm:$0xff]
      %v289 = vld [vmem:[%s261 + $0x80] sm:$0xff]
      %v290 = vld [vmem:[%s261 + $0x88] sm:$0xff]
      %v291 = vld [vmem:[%s261 + $0x90] sm:$0xff]
      %v292 = vld [vmem:[%s261 + $0x98] sm:$0xff]
      %v293 = vld [vmem:[%s261 + $0xa0] sm:$0xff]
      %v294 = vld [vmem:[%s261 + $0xa8] sm:$0xff]
      %v295 = vld [vmem:[%s261 + $0xb0] sm:$0xff]
      %v296 = vld [vmem:[%s261 + $0xb8] sm:$0xff]
      %v297 = vld [vmem:[%s261 + $0xc0] sm:$0xff]
      %v298 = vld [vmem:[%s261 + $0xc8] sm:$0xff]
      %v299 = vld [vmem:[%s261 + $0xd0] sm:$0xff]
      %v300 = vld [vmem:[%s261 + $0xd8] sm:$0xff]
      %v301 = vld [vmem:[%s261 + $0xe0] sm:$0xff]
      %v302 = vld [vmem:[%s261 + $0xe8] sm:$0xff]
      %v303 = vld [vmem:[%s261 + $0xf0] sm:$0xff]
      %v304 = vld [vmem:[%s261 + $0xf8] sm:$0xff]
      %v305 = vld [vmem:[%s261 + $0x100] sm:$0xff]
      %v306 = vld [vmem:[%s261 + $0x108] sm:$0xff]
      %v307 = vld [vmem:[%s261 + $0x110] sm:$0xff]
      %v308 = vld [vmem:[%s261 + $0x118] sm:$0xff]
      %v309 = vld [vmem:[%s261 + $0x120] sm:$0xff]
      %v310 = vld [vmem:[%s261 + $0x128] sm:$0xff]
      %v311 = vld [vmem:[%s261 + $0x130] sm:$0xff]
      %v312 = vld [vmem:[%s261 + $0x138] sm:$0xff]
      %v313 = vld [vmem:[%s261 + $0x140] sm:$0xff]
      %v314 = vld [vmem:[%s261 + $0x148] sm:$0xff]
      %v315 = vld [vmem:[%s261 + $0x150] sm:$0xff]
      %v316 = vld [vmem:[%s261 + $0x158] sm:$0xff]
      %v317 = vld [vmem:[%s261 + $0x160] sm:$0xff]
      %v318 = vld [vmem:[%s261 + $0x168] sm:$0xff]
      %v319 = vld [vmem:[%s261 + $0x170] sm:$0xff]
      %v320 = vld [vmem:[%s261 + $0x178] sm:$0xff]
      %v321 = vld [vmem:[%s261 + $0x180] sm:$0xff]
      %v322 = vld [vmem:[%s261 + $0x188] sm:$0xff]
      %v323 = vld [vmem:[%s261 + $0x190] sm:$0xff]
      %v324 = vld [vmem:[%s261 + $0x198] sm:$0xff]
      %v325 = vld [vmem:[%s261 + $0x1a0] sm:$0xff]
      %v326 = vld [vmem:[%s261 + $0x1a8] sm:$0xff]
      %v327 = vrot.slane %v273, 1
      %v328 = vrot.slane %v274, 1
      %v329 = vrot.slane %v275, 1
      %v330 = vrot.slane %v276, 1
      %v331 = vrot.slane %v277, 1
      %v332 = vrot.slane %v278, 1
      %v333 = vrot.slane %v279, 1
      %v334 = vrot.slane %v280, 1
      %v335 = vrot.slane %v281, 1
      %v336 = vrot.slane %v282, 1
      %v337 = vrot.slane %v283, 1
      %v338 = vrot.slane %v284, 1
      %v339 = vrot.slane %v285, 1
      %v340 = vrot.slane %v286, 1
      %v341 = vrot.slane %v287, 1
      %v342 = vrot.slane %v288, 1
      %v343 = vrot.slane %v289, 1
      %v344 = vrot.slane %v290, 1
      %v345 = vrot.slane %v291, 1
      %v346 = vrot.slane %v292, 1
      %v347 = vrot.slane %v293, 1
      %v348 = vrot.slane %v294, 1
      %v349 = vrot.slane %v295, 1
      %v350 = vrot.slane %v296, 1
      %v351 = vrot.slane %v297, 1
      %v352 = vrot.slane %v298, 1
      %v353 = vrot.slane %v299, 1
      %v354 = vrot.slane %v300, 1
      %v355 = vrot.slane %v301, 1
      %v356 = vrot.slane %v302, 1
      %v357 = vrot.slane %v303, 1
      %v358 = vrot.slane %v304, 1
      %v359 = vrot.slane %v305, 1
      %v360 = vrot.slane %v306, 1
      %v361 = vrot.slane %v307, 1
      %v362 = vrot.slane %v308, 1
      %v363 = vrot.slane %v309, 1
      %v364 = vrot.slane %v310, 1
      %v365 = vrot.slane %v311, 1
      %v366 = vrot.slane %v312, 1
      %v367 = vrot.slane %v313, 1
      %v368 = vrot.slane %v314, 1
      %v369 = vrot.slane %v315, 1
      %v370 = vrot.slane %v316, 1
      %v371 = vrot.slane %v317, 1
      %v372 = vrot.slane %v318, 1
      %v373 = vrot.slane %v319, 1
      %v374 = vrot.slane %v320, 1
      %v375 = vrot.slane %v321, 1
      %v376 = vrot.slane %v322, 1
      %v377 = vrot.slane %v323, 1
      %v378 = vrot.slane %v324, 1
      %v379 = vrot.slane %v325, 1
      %v380 = vrot.slane %v326, 1
      %v381 = vlaneseq
      %v382 = vshrl.u32 %v381, 7
      %vm383 = vcmp.lt.s32.totalorder %v382, 7
      %v384 = vsel %vm383, %v379, %v380
      %v385 = vsel %vm383, %v378, %v379
      %v386 = vsel %vm383, %v377, %v378
      %v387 = vsel %vm383, %v376, %v377
      %v388 = vsel %vm383, %v375, %v376
      %v389 = vsel %vm383, %v374, %v375
      %v390 = vsel %vm383, %v373, %v374
      %v391 = vsel %vm383, %v372, %v373
      %v392 = vsel %vm383, %v371, %v372
      %v393 = vsel %vm383, %v370, %v371
      %v394 = vsel %vm383, %v369, %v370
      %v395 = vsel %vm383, %v368, %v369
      %v396 = vsel %vm383, %v367, %v368
      %v397 = vsel %vm383, %v366, %v367
      %v398 = vsel %vm383, %v365, %v366
      %v399 = vsel %vm383, %v364, %v365
      %v400 = vsel %vm383, %v363, %v364
      %v401 = vsel %vm383, %v362, %v363
      %v402 = vsel %vm383, %v361, %v362
      %v403 = vsel %vm383, %v360, %v361
      %v404 = vsel %vm383, %v359, %v360
      %v405 = vsel %vm383, %v358, %v359
      %v406 = vsel %vm383, %v357, %v358
      %v407 = vsel %vm383, %v356, %v357
      %v408 = vsel %vm383, %v355, %v356
      %v409 = vsel %vm383, %v354, %v355
      %v410 = vsel %vm383, %v353, %v354
      %v411 = vsel %vm383, %v352, %v353
      %v412 = vsel %vm383, %v351, %v352
      %v413 = vsel %vm383, %v350, %v351
      %v414 = vsel %vm383, %v349, %v350
      %v415 = vsel %vm383, %v348, %v349
      %v416 = vsel %vm383, %v347, %v348
      %v417 = vsel %vm383, %v346, %v347
      %v418 = vsel %vm383, %v345, %v346
      %v419 = vsel %vm383, %v344, %v345
      %v420 = vsel %vm383, %v343, %v344
      %v421 = vsel %vm383, %v342, %v343
      %v422 = vsel %vm383, %v341, %v342
      %v423 = vsel %vm383, %v340, %v341
      %v424 = vsel %vm383, %v339, %v340
      %v425 = vsel %vm383, %v338, %v339
      %v426 = vsel %vm383, %v337, %v338
      %v427 = vsel %vm383, %v336, %v337
      %v428 = vsel %vm383, %v335, %v336
      %v429 = vsel %vm383, %v334, %v335
      %v430 = vsel %vm383, %v333, %v334
      %v431 = vsel %vm383, %v332, %v333
      %v432 = vsel %vm383, %v331, %v332
      %v433 = vsel %vm383, %v330, %v331
      %v434 = vsel %vm383, %v329, %v330
      %v435 = vsel %vm383, %v328, %v329
      %v436 = vsel %vm383, %v327, %v328
      %v437 = vrot.slane %v273, 2
      %v438 = vrot.slane %v274, 2
      %v439 = vrot.slane %v275, 2
      %v440 = vrot.slane %v276, 2
      %v441 = vrot.slane %v277, 2
      %v442 = vrot.slane %v278, 2
      %v443 = vrot.slane %v279, 2
      %v444 = vrot.slane %v280, 2
      %v445 = vrot.slane %v281, 2
      %v446 = vrot.slane %v282, 2
      %v447 = vrot.slane %v283, 2
      %v448 = vrot.slane %v284, 2
      %v449 = vrot.slane %v285, 2
      %v450 = vrot.slane %v286, 2
      %v451 = vrot.slane %v287, 2
      %v452 = vrot.slane %v288, 2
      %v453 = vrot.slane %v289, 2
      %v454 = vrot.slane %v290, 2
      %v455 = vrot.slane %v291, 2
      %v456 = vrot.slane %v292, 2
      %v457 = vrot.slane %v293, 2
      %v458 = vrot.slane %v294, 2
      %v459 = vrot.slane %v295, 2
      %v460 = vrot.slane %v296, 2
      %v461 = vrot.slane %v297, 2
      %v462 = vrot.slane %v298, 2
      %v463 = vrot.slane %v299, 2
      %v464 = vrot.slane %v300, 2
      %v465 = vrot.slane %v301, 2
      %v466 = vrot.slane %v302, 2
      %v467 = vrot.slane %v303, 2
      %v468 = vrot.slane %v304, 2
      %v469 = vrot.slane %v305, 2
      %v470 = vrot.slane %v306, 2
      %v471 = vrot.slane %v307, 2
      %v472 = vrot.slane %v308, 2
      %v473 = vrot.slane %v309, 2
      %v474 = vrot.slane %v310, 2
      %v475 = vrot.slane %v311, 2
      %v476 = vrot.slane %v312, 2
      %v477 = vrot.slane %v313, 2
      %v478 = vrot.slane %v314, 2
      %v479 = vrot.slane %v315, 2
      %v480 = vrot.slane %v316, 2
      %v481 = vrot.slane %v317, 2
      %v482 = vrot.slane %v318, 2
      %v483 = vrot.slane %v319, 2
      %v484 = vrot.slane %v320, 2
      %v485 = vrot.slane %v321, 2
      %v486 = vrot.slane %v322, 2
      %v487 = vrot.slane %v323, 2
      %v488 = vrot.slane %v324, 2
      %v489 = vrot.slane %v325, 2
      %v490 = vrot.slane %v326, 2
      %vm491 = vcmp.lt.s32.totalorder %v382, 6
      %v492 = vsel %vm491, %v489, %v490
      %v493 = vsel %vm491, %v488, %v489
      %v494 = vsel %vm491, %v487, %v488
      %v495 = vsel %vm491, %v486, %v487
      %v496 = vsel %vm491, %v485, %v486
      %v497 = vsel %vm491, %v484, %v485
      %v498 = vsel %vm491, %v483, %v484
      %v499 = vsel %vm491, %v482, %v483
      %v500 = vsel %vm491, %v481, %v482
      %v501 = vsel %vm491, %v480, %v481
      %v502 = vsel %vm491, %v479, %v480
      %v503 = vsel %vm491, %v478, %v479
      %v504 = vsel %vm491, %v477, %v478
      %v505 = vsel %vm491, %v476, %v477
      %v506 = vsel %vm491, %v475, %v476
      %v507 = vsel %vm491, %v474, %v475
      %v508 = vsel %vm491, %v473, %v474
      %v509 = vsel %vm491, %v472, %v473
      %v510 = vsel %vm491, %v471, %v472
      %v511 = vsel %vm491, %v470, %v471
      %v512 = vsel %vm491, %v469, %v470
      %v513 = vsel %vm491, %v468, %v469
      %v514 = vsel %vm491, %v467, %v468
      %v515 = vsel %vm491, %v466, %v467
      %v516 = vsel %vm491, %v465, %v466
      %v517 = vsel %vm491, %v464, %v465
      %v518 = vsel %vm491, %v463, %v464
      %v519 = vsel %vm491, %v462, %v463
      %v520 = vsel %vm491, %v461, %v462
      %v521 = vsel %vm491, %v460, %v461
      %v522 = vsel %vm491, %v459, %v460
      %v523 = vsel %vm491, %v458, %v459
      %v524 = vsel %vm491, %v457, %v458
      %v525 = vsel %vm491, %v456, %v457
      %v526 = vsel %vm491, %v455, %v456
      %v527 = vsel %vm491, %v454, %v455
      %v528 = vsel %vm491, %v453, %v454
      %v529 = vsel %vm491, %v452, %v453
      %v530 = vsel %vm491, %v451, %v452
      %v531 = vsel %vm491, %v450, %v451
      %v532 = vsel %vm491, %v449, %v450
      %v533 = vsel %vm491, %v448, %v449
      %v534 = vsel %vm491, %v447, %v448
      %v535 = vsel %vm491, %v446, %v447
      %v536 = vsel %vm491, %v445, %v446
      %v537 = vsel %vm491, %v444, %v445
      %v538 = vsel %vm491, %v443, %v444
      %v539 = vsel %vm491, %v442, %v443
      %v540 = vsel %vm491, %v441, %v442
      %v541 = vsel %vm491, %v440, %v441
      %v542 = vsel %vm491, %v439, %v440
      %v543 = vsel %vm491, %v438, %v439
      %v544 = vsel %vm491, %v437, %v438
      %v545 = vpack.c.bf16 %v274, %v273
      %v546 = vpack.c.bf16 %v276, %v275
      %v547 = vpack.c.bf16 %v278, %v277
      %v548 = vpack.c.bf16 %v280, %v279
      %v549 = vpack.c.bf16 %v282, %v281
      %v550 = vpack.c.bf16 %v284, %v283
      %v551 = vpack.c.bf16 %v286, %v285
      %v552 = vpack.c.bf16 %v288, %v287
      %v553 = vpack.c.bf16 %v290, %v289
      %v554 = vpack.c.bf16 %v292, %v291
      %v555 = vpack.c.bf16 %v294, %v293
      %v556 = vpack.c.bf16 %v296, %v295
      %v557 = vpack.c.bf16 %v298, %v297
      %v558 = vpack.c.bf16 %v300, %v299
      %v559 = vpack.c.bf16 %v302, %v301
      %v560 = vpack.c.bf16 %v304, %v303
      %v561 = vpack.c.bf16 %v306, %v305
      %v562 = vpack.c.bf16 %v308, %v307
      %v563 = vpack.c.bf16 %v310, %v309
      %v564 = vpack.c.bf16 %v312, %v311
      %v565 = vpack.c.bf16 %v314, %v313
      %v566 = vpack.c.bf16 %v316, %v315
      %v567 = vpack.c.bf16 %v318, %v317
      %v568 = vpack.c.bf16 %v319, %v319
      %v569 = vld [vmem:[%s2] sm:$0xf]
      %v570 = vld [vmem:[%s2 + $0x4] sm:$0xf]
      %v571 = vld [vmem:[%s2 + $0x8] sm:$0xf]
      %v572 = vld [vmem:[%s2 + $0xc] sm:$0xf]
      %v573 = vld [vmem:[%s2 + $0x10] sm:$0xf]
      %v574 = vld [vmem:[%s2 + $0x14] sm:$0xf]
      %v575 = vld [vmem:[%s2 + $0x18] sm:$0xf]
      %v576 = vld [vmem:[%s2 + $0x1c] sm:$0xf]
      %v577 = vpack.c.bf16 %v435, %v436
      %v578 = vpack.c.bf16 %v433, %v434
      %v579 = vpack.c.bf16 %v431, %v432
      %v580 = vpack.c.bf16 %v429, %v430
      %v581 = vpack.c.bf16 %v427, %v428
      %v582 = vpack.c.bf16 %v425, %v426
      %v583 = vpack.c.bf16 %v423, %v424
      %v584 = vpack.c.bf16 %v421, %v422
      %v585 = vpack.c.bf16 %v419, %v420
      %v586 = vpack.c.bf16 %v417, %v418
      %v587 = vpack.c.bf16 %v415, %v416
      %v588 = vpack.c.bf16 %v413, %v414
      %v589 = vpack.c.bf16 %v411, %v412
      %v590 = vpack.c.bf16 %v409, %v410
      %v591 = vpack.c.bf16 %v407, %v408
      %v592 = vpack.c.bf16 %v405, %v406
      %v593 = vpack.c.bf16 %v403, %v404
      %v594 = vpack.c.bf16 %v401, %v402
      %v595 = vpack.c.bf16 %v399, %v400
      %v596 = vpack.c.bf16 %v397, %v398
      %v597 = vpack.c.bf16 %v395, %v396
      %v598 = vpack.c.bf16 %v393, %v394
      %v599 = vpack.c.bf16 %v391, %v392
      %v600 = vpack.c.bf16 %v390, %v390
      %v601 = vld [vmem:[%s2 + $0x20] sm:$0xf]
      %v602 = vld [vmem:[%s2 + $0x24] sm:$0xf]
      %v603 = vld [vmem:[%s2 + $0x28] sm:$0xf]
      %v604 = vld [vmem:[%s2 + $0x2c] sm:$0xf]
      %v605 = vld [vmem:[%s2 + $0x30] sm:$0xf]
      %v606 = vld [vmem:[%s2 + $0x34] sm:$0xf]
      %v607 = vld [vmem:[%s2 + $0x38] sm:$0xf]
      %v608 = vld [vmem:[%s2 + $0x3c] sm:$0xf]
      %v617 = vunpack.c.l.b16 %v601
      %v618 = vunpack.c.l.b16 %v602
      %v619 = vunpack.c.l.b16 %v603
      %v620 = vunpack.c.l.b16 %v604
      %v621 = vunpack.c.l.b16 %v605
      %v622 = vunpack.c.l.b16 %v606
      %v623 = vunpack.c.l.b16 %v607
      %v624 = vunpack.c.l.b16 %v608
      %v625 = vpack.c.b16 %v618, %v617
      %v626 = vpack.c.b16 %v620, %v619
      %v627 = vpack.c.b16 %v622, %v621
      %v628 = vpack.c.b16 %v624, %v623
      %vm633 = vcmask 523264
      %v635 = vsel %vm633, %v577, 0
      %v638 = vsel %vm633, %v578, 0
      %v641 = vsel %vm633, %v579, 0
      %v644 = vsel %vm633, %v580, 0
      %v647 = vsel %vm633, %v581, 0
      %v650 = vsel %vm633, %v582, 0
      %v653 = vsel %vm633, %v583, 0
      %v656 = vsel %vm633, %v584, 0
      %v659 = vsel %vm633, %v585, 0
      %v662 = vsel %vm633, %v586, 0
      %v665 = vsel %vm633, %v587, 0
      %v668 = vsel %vm633, %v588, 0
      %v671 = vsel %vm633, %v589, 0
      %v674 = vsel %vm633, %v590, 0
      %v677 = vsel %vm633, %v591, 0
      %v680 = vsel %vm633, %v592, 0
      %v683 = vsel %vm633, %v593, 0
      %v686 = vsel %vm633, %v594, 0
      %v689 = vsel %vm633, %v595, 0
      %v692 = vsel %vm633, %v596, 0
      %v695 = vsel %vm633, %v597, 0
      %v698 = vsel %vm633, %v598, 0
      %v701 = vsel %vm633, %v599, 0
      %v704 = vsel %vm633, %v600, 0
      %706 = vmatpush.bf16.msra.mxu0 0
      %707 = vmatpush.bf16.msra.mxu0 0
      %708 = vmatpush.bf16.msra.mxu0 0
      %709 = vmatpush.bf16.msra.mxu0 0
      %710 = vmatpush.bf16.msra.mxu0 %v628
      %711 = vmatpush.bf16.msra.mxu0 %v627
      %712 = vmatpush.bf16.msra.mxu0 %v626
      %713 = vmatpush.bf16.msra.mxu0 %v625
      %714 = vmatmul.bf16.gmra.mxu0 %v635
      %v715 = vpop.f32.mrf.mxu0
      %v716 = vadd.f32 0.0, %v715
      %v717 = vpop.f32.mrf.mxu0
      %v718 = vadd.f32 0.0, %v717
      %719 = vmatmul.bf16.gmra.mxu0 %v638
      %v720 = vpop.f32.mrf.mxu0
      %v721 = vadd.f32 0.0, %v720
      %v722 = vpop.f32.mrf.mxu0
      %v723 = vadd.f32 0.0, %v722
      %724 = vmatmul.bf16.gmra.mxu0 %v641
      %v725 = vpop.f32.mrf.mxu0
      %v726 = vadd.f32 0.0, %v725
      %v727 = vpop.f32.mrf.mxu0
      %v728 = vadd.f32 0.0, %v727
      %729 = vmatmul.bf16.gmra.mxu0 %v644
      %v730 = vpop.f32.mrf.mxu0
      %v731 = vadd.f32 0.0, %v730
      %v732 = vpop.f32.mrf.mxu0
      %v733 = vadd.f32 0.0, %v732
      %734 = vmatmul.bf16.gmra.mxu0 %v647
      %v735 = vpop.f32.mrf.mxu0
      %v736 = vadd.f32 0.0, %v735
      %v737 = vpop.f32.mrf.mxu0
      %v738 = vadd.f32 0.0, %v737
      %739 = vmatmul.bf16.gmra.mxu0 %v650
      %v740 = vpop.f32.mrf.mxu0
      %v741 = vadd.f32 0.0, %v740
      %v742 = vpop.f32.mrf.mxu0
      %v743 = vadd.f32 0.0, %v742
      %744 = vmatmul.bf16.gmra.mxu0 %v653
      %v745 = vpop.f32.mrf.mxu0
      %v746 = vadd.f32 0.0, %v745
      %v747 = vpop.f32.mrf.mxu0
      %v748 = vadd.f32 0.0, %v747
      %749 = vmatmul.bf16.gmra.mxu0 %v656
      %v750 = vpop.f32.mrf.mxu0
      %v751 = vadd.f32 0.0, %v750
      %v752 = vpop.f32.mrf.mxu0
      %v753 = vadd.f32 0.0, %v752
      %754 = vmatmul.bf16.gmra.mxu0 %v659
      %v755 = vpop.f32.mrf.mxu0
      %v756 = vadd.f32 0.0, %v755
      %v757 = vpop.f32.mrf.mxu0
      %v758 = vadd.f32 0.0, %v757
      %759 = vmatmul.bf16.gmra.mxu0 %v662
      %v760 = vpop.f32.mrf.mxu0
      %v761 = vadd.f32 0.0, %v760
      %v762 = vpop.f32.mrf.mxu0
      %v763 = vadd.f32 0.0, %v762
      %764 = vmatmul.bf16.gmra.mxu0 %v665
      %v765 = vpop.f32.mrf.mxu0
      %v766 = vadd.f32 0.0, %v765
      %v767 = vpop.f32.mrf.mxu0
      %v768 = vadd.f32 0.0, %v767
      %769 = vmatmul.bf16.gmra.mxu0 %v668
      %v770 = vpop.f32.mrf.mxu0
      %v771 = vadd.f32 0.0, %v770
      %v772 = vpop.f32.mrf.mxu0
      %v773 = vadd.f32 0.0, %v772
      %774 = vmatmul.bf16.gmra.mxu0 %v671
      %v775 = vpop.f32.mrf.mxu0
      %v776 = vadd.f32 0.0, %v775
      %v777 = vpop.f32.mrf.mxu0
      %v778 = vadd.f32 0.0, %v777
      %779 = vmatmul.bf16.gmra.mxu0 %v674
      %v780 = vpop.f32.mrf.mxu0
      %v781 = vadd.f32 0.0, %v780
      %v782 = vpop.f32.mrf.mxu0
      %v783 = vadd.f32 0.0, %v782
      %784 = vmatmul.bf16.gmra.mxu0 %v677
      %v785 = vpop.f32.mrf.mxu0
      %v786 = vadd.f32 0.0, %v785
      %v787 = vpop.f32.mrf.mxu0
      %v788 = vadd.f32 0.0, %v787
      %789 = vmatmul.bf16.gmra.mxu0 %v680
      %v790 = vpop.f32.mrf.mxu0
      %v791 = vadd.f32 0.0, %v790
      %v792 = vpop.f32.mrf.mxu0
      %v793 = vadd.f32 0.0, %v792
      %794 = vmatmul.bf16.gmra.mxu0 %v683
      %v795 = vpop.f32.mrf.mxu0
      %v796 = vadd.f32 0.0, %v795
      %v797 = vpop.f32.mrf.mxu0
      %v798 = vadd.f32 0.0, %v797
      %799 = vmatmul.bf16.gmra.mxu0 %v686
      %v800 = vpop.f32.mrf.mxu0
      %v801 = vadd.f32 0.0, %v800
      %v802 = vpop.f32.mrf.mxu0
      %v803 = vadd.f32 0.0, %v802
      %804 = vmatmul.bf16.gmra.mxu0 %v689
      %v805 = vpop.f32.mrf.mxu0
      %v806 = vadd.f32 0.0, %v805
      %v807 = vpop.f32.mrf.mxu0
      %v808 = vadd.f32 0.0, %v807
      %809 = vmatmul.bf16.gmra.mxu0 %v692
      %v810 = vpop.f32.mrf.mxu0
      %v811 = vadd.f32 0.0, %v810
      %v812 = vpop.f32.mrf.mxu0
      %v813 = vadd.f32 0.0, %v812
      %814 = vmatmul.bf16.gmra.mxu0 %v695
      %v815 = vpop.f32.mrf.mxu0
      %v816 = vadd.f32 0.0, %v815
      %v817 = vpop.f32.mrf.mxu0
      %v818 = vadd.f32 0.0, %v817
      %819 = vmatmul.bf16.gmra.mxu0 %v698
      %v820 = vpop.f32.mrf.mxu0
      %v821 = vadd.f32 0.0, %v820
      %v822 = vpop.f32.mrf.mxu0
      %v823 = vadd.f32 0.0, %v822
      %824 = vmatmul.bf16.gmra.mxu0 %v701
      %v825 = vpop.f32.mrf.mxu0
      %v826 = vadd.f32 0.0, %v825
      %v827 = vpop.f32.mrf.mxu0
      %v828 = vadd.f32 0.0, %v827
      %829 = vmatmul.bf16.gmra.mxu0 %v704
      %v830 = vpop.f32.mrf.mxu0
      %v831 = vadd.f32 0.0, %v830
      %v832 = vpop.f32.mrf.mxu0
      %833 = vdwg.mxu0
      %v842 = vunpack.c.l.b16 %v569
      %v843 = vunpack.c.l.b16 %v570
      %v844 = vunpack.c.l.b16 %v571
      %v845 = vunpack.c.l.b16 %v572
      %v846 = vunpack.c.l.b16 %v573
      %v847 = vunpack.c.l.b16 %v574
      %v848 = vunpack.c.l.b16 %v575
      %v849 = vunpack.c.l.b16 %v576
      %v850 = vpack.c.b16 %v843, %v842
      %v851 = vpack.c.b16 %v845, %v844
      %v852 = vpack.c.b16 %v847, %v846
      %v853 = vpack.c.b16 %v849, %v848
      %v859 = vsel %vm633, %v545, 0
      %v862 = vsel %vm633, %v546, 0
      %v865 = vsel %vm633, %v547, 0
      %v868 = vsel %vm633, %v548, 0
      %v871 = vsel %vm633, %v549, 0
      %v874 = vsel %vm633, %v550, 0
      %v877 = vsel %vm633, %v551, 0
      %v880 = vsel %vm633, %v552, 0
      %v883 = vsel %vm633, %v553, 0
      %v886 = vsel %vm633, %v554, 0
      %v889 = vsel %vm633, %v555, 0
      %v892 = vsel %vm633, %v556, 0
      %v895 = vsel %vm633, %v557, 0
      %v898 = vsel %vm633, %v558, 0
      %v901 = vsel %vm633, %v559, 0
      %v904 = vsel %vm633, %v560, 0
      %v907 = vsel %vm633, %v561, 0
      %v910 = vsel %vm633, %v562, 0
      %v913 = vsel %vm633, %v563, 0
      %v916 = vsel %vm633, %v564, 0
      %v919 = vsel %vm633, %v565, 0
      %v922 = vsel %vm633, %v566, 0
      %v925 = vsel %vm633, %v567, 0
      %v928 = vsel %vm633, %v568, 0
      %930 = vmatpush.bf16.msra.mxu0 0
      %931 = vmatpush.bf16.msra.mxu0 0
      %932 = vmatpush.bf16.msra.mxu0 0
      %933 = vmatpush.bf16.msra.mxu0 0
      %934 = vmatpush.bf16.msra.mxu0 %v853
      %935 = vmatpush.bf16.msra.mxu0 %v852
      %936 = vmatpush.bf16.msra.mxu0 %v851
      %937 = vmatpush.bf16.msra.mxu0 %v850
      %938 = vmatmul.bf16.gmra.mxu0 %v859
      %v939 = vpop.f32.mrf.mxu0
      %v940 = vadd.f32 %v716, %v939
      %v941 = vpop.f32.mrf.mxu0
      %v942 = vadd.f32 %v718, %v941
      %943 = vmatmul.bf16.gmra.mxu0 %v862
      %v944 = vpop.f32.mrf.mxu0
      %v945 = vadd.f32 %v721, %v944
      %v946 = vpop.f32.mrf.mxu0
      %v947 = vadd.f32 %v723, %v946
      %948 = vmatmul.bf16.gmra.mxu0 %v865
      %v949 = vpop.f32.mrf.mxu0
      %v950 = vadd.f32 %v726, %v949
      %v951 = vpop.f32.mrf.mxu0
      %v952 = vadd.f32 %v728, %v951
      %953 = vmatmul.bf16.gmra.mxu0 %v868
      %v954 = vpop.f32.mrf.mxu0
      %v955 = vadd.f32 %v731, %v954
      %v956 = vpop.f32.mrf.mxu0
      %v957 = vadd.f32 %v733, %v956
      %958 = vmatmul.bf16.gmra.mxu0 %v871
      %v959 = vpop.f32.mrf.mxu0
      %v960 = vadd.f32 %v736, %v959
      %v961 = vpop.f32.mrf.mxu0
      %v962 = vadd.f32 %v738, %v961
      %963 = vmatmul.bf16.gmra.mxu0 %v874
      %v964 = vpop.f32.mrf.mxu0
      %v965 = vadd.f32 %v741, %v964
      %v966 = vpop.f32.mrf.mxu0
      %v967 = vadd.f32 %v743, %v966
      %968 = vmatmul.bf16.gmra.mxu0 %v877
      %v969 = vpop.f32.mrf.mxu0
      %v970 = vadd.f32 %v746, %v969
      %v971 = vpop.f32.mrf.mxu0
      %v972 = vadd.f32 %v748, %v971
      %973 = vmatmul.bf16.gmra.mxu0 %v880
      %v974 = vpop.f32.mrf.mxu0
      %v975 = vadd.f32 %v751, %v974
      %v976 = vpop.f32.mrf.mxu0
      %v977 = vadd.f32 %v753, %v976
      %978 = vmatmul.bf16.gmra.mxu0 %v883
      %v979 = vpop.f32.mrf.mxu0
      %v980 = vadd.f32 %v756, %v979
      %v981 = vpop.f32.mrf.mxu0
      %v982 = vadd.f32 %v758, %v981
      %983 = vmatmul.bf16.gmra.mxu0 %v886
      %v984 = vpop.f32.mrf.mxu0
      %v985 = vadd.f32 %v761, %v984
      %v986 = vpop.f32.mrf.mxu0
      %v987 = vadd.f32 %v763, %v986
      %988 = vmatmul.bf16.gmra.mxu0 %v889
      %v989 = vpop.f32.mrf.mxu0
      %v990 = vadd.f32 %v766, %v989
      %v991 = vpop.f32.mrf.mxu0
      %v992 = vadd.f32 %v768, %v991
      %993 = vmatmul.bf16.gmra.mxu0 %v892
      %v994 = vpop.f32.mrf.mxu0
      %v995 = vadd.f32 %v771, %v994
      %v996 = vpop.f32.mrf.mxu0
      %v997 = vadd.f32 %v773, %v996
      %998 = vmatmul.bf16.gmra.mxu0 %v895
      %v999 = vpop.f32.mrf.mxu0
      %v1000 = vadd.f32 %v776, %v999
      %v1001 = vpop.f32.mrf.mxu0
      %v1002 = vadd.f32 %v778, %v1001
      %1003 = vmatmul.bf16.gmra.mxu0 %v898
      %v1004 = vpop.f32.mrf.mxu0
      %v1005 = vadd.f32 %v781, %v1004
      %v1006 = vpop.f32.mrf.mxu0
      %v1007 = vadd.f32 %v783, %v1006
      %1008 = vmatmul.bf16.gmra.mxu0 %v901
      %v1009 = vpop.f32.mrf.mxu0
      %v1010 = vadd.f32 %v786, %v1009
      %v1011 = vpop.f32.mrf.mxu0
      %v1012 = vadd.f32 %v788, %v1011
      %1013 = vmatmul.bf16.gmra.mxu0 %v904
      %v1014 = vpop.f32.mrf.mxu0
      %v1015 = vadd.f32 %v791, %v1014
      %v1016 = vpop.f32.mrf.mxu0
      %v1017 = vadd.f32 %v793, %v1016
      %1018 = vmatmul.bf16.gmra.mxu0 %v907
      %v1019 = vpop.f32.mrf.mxu0
      %v1020 = vadd.f32 %v796, %v1019
      %v1021 = vpop.f32.mrf.mxu0
      %v1022 = vadd.f32 %v798, %v1021
      %1023 = vmatmul.bf16.gmra.mxu0 %v910
      %v1024 = vpop.f32.mrf.mxu0
      %v1025 = vadd.f32 %v801, %v1024
      %v1026 = vpop.f32.mrf.mxu0
      %v1027 = vadd.f32 %v803, %v1026
      %1028 = vmatmul.bf16.gmra.mxu0 %v913
      %v1029 = vpop.f32.mrf.mxu0
      %v1030 = vadd.f32 %v806, %v1029
      %v1031 = vpop.f32.mrf.mxu0
      %v1032 = vadd.f32 %v808, %v1031
      %1033 = vmatmul.bf16.gmra.mxu0 %v916
      %v1034 = vpop.f32.mrf.mxu0
      %v1035 = vadd.f32 %v811, %v1034
      %v1036 = vpop.f32.mrf.mxu0
      %v1037 = vadd.f32 %v813, %v1036
      %1038 = vmatmul.bf16.gmra.mxu0 %v919
      %v1039 = vpop.f32.mrf.mxu0
      %v1040 = vadd.f32 %v816, %v1039
      %v1041 = vpop.f32.mrf.mxu0
      %v1042 = vadd.f32 %v818, %v1041
      %1043 = vmatmul.bf16.gmra.mxu0 %v922
      %v1044 = vpop.f32.mrf.mxu0
      %v1045 = vadd.f32 %v821, %v1044
      %v1046 = vpop.f32.mrf.mxu0
      %v1047 = vadd.f32 %v823, %v1046
      %1048 = vmatmul.bf16.gmra.mxu0 %v925
      %v1049 = vpop.f32.mrf.mxu0
      %v1050 = vadd.f32 %v826, %v1049
      %v1051 = vpop.f32.mrf.mxu0
      %v1052 = vadd.f32 %v828, %v1051
      %1053 = vmatmul.bf16.gmra.mxu0 %v928
      %v1054 = vpop.f32.mrf.mxu0
      %v1055 = vadd.f32 %v831, %v1054
      %v1056 = vpop.f32.mrf.mxu0
      %1057 = vdwg.mxu0
      %v1058 = vpack.c.bf16 %v543, %v544
      %v1059 = vpack.c.bf16 %v541, %v542
      %v1060 = vpack.c.bf16 %v539, %v540
      %v1061 = vpack.c.bf16 %v537, %v538
      %v1062 = vpack.c.bf16 %v535, %v536
      %v1063 = vpack.c.bf16 %v533, %v534
      %v1064 = vpack.c.bf16 %v531, %v532
      %v1065 = vpack.c.bf16 %v529, %v530
      %v1066 = vpack.c.bf16 %v527, %v528
      %v1067 = vpack.c.bf16 %v525, %v526
      %v1068 = vpack.c.bf16 %v523, %v524
      %v1069 = vpack.c.bf16 %v521, %v522
      %v1070 = vpack.c.bf16 %v519, %v520
      %v1071 = vpack.c.bf16 %v517, %v518
      %v1072 = vpack.c.bf16 %v515, %v516
      %v1073 = vpack.c.bf16 %v513, %v514
      %v1074 = vpack.c.bf16 %v511, %v512
      %v1075 = vpack.c.bf16 %v509, %v510
      %v1076 = vpack.c.bf16 %v507, %v508
      %v1077 = vpack.c.bf16 %v505, %v506
      %v1078 = vpack.c.bf16 %v503, %v504
      %v1079 = vpack.c.bf16 %v501, %v502
      %v1080 = vpack.c.bf16 %v499, %v500
      %v1081 = vpack.c.bf16 %v498, %v498
      %v1082 = vld [vmem:[%s2 + $0x40] sm:$0xf]
      %v1083 = vld [vmem:[%s2 + $0x44] sm:$0xf]
      %v1084 = vld [vmem:[%s2 + $0x48] sm:$0xf]
      %v1085 = vld [vmem:[%s2 + $0x4c] sm:$0xf]
      %v1086 = vld [vmem:[%s2 + $0x50] sm:$0xf]
      %v1087 = vld [vmem:[%s2 + $0x54] sm:$0xf]
      %v1088 = vld [vmem:[%s2 + $0x58] sm:$0xf]
      %v1089 = vld [vmem:[%s2 + $0x5c] sm:$0xf]
      %v1098 = vunpack.c.l.b16 %v1082
      %v1099 = vunpack.c.l.b16 %v1083
      %v1100 = vunpack.c.l.b16 %v1084
      %v1101 = vunpack.c.l.b16 %v1085
      %v1102 = vunpack.c.l.b16 %v1086
      %v1103 = vunpack.c.l.b16 %v1087
      %v1104 = vunpack.c.l.b16 %v1088
      %v1105 = vunpack.c.l.b16 %v1089
      %v1106 = vpack.c.b16 %v1099, %v1098
      %v1107 = vpack.c.b16 %v1101, %v1100
      %v1108 = vpack.c.b16 %v1103, %v1102
      %v1109 = vpack.c.b16 %v1105, %v1104
      %v1115 = vsel %vm633, %v1058, 0
      %v1118 = vsel %vm633, %v1059, 0
      %v1121 = vsel %vm633, %v1060, 0
      %v1124 = vsel %vm633, %v1061, 0
      %v1127 = vsel %vm633, %v1062, 0
      %v1130 = vsel %vm633, %v1063, 0
      %v1133 = vsel %vm633, %v1064, 0
      %v1136 = vsel %vm633, %v1065, 0
      %v1139 = vsel %vm633, %v1066, 0
      %v1142 = vsel %vm633, %v1067, 0
      %v1145 = vsel %vm633, %v1068, 0
      %v1148 = vsel %vm633, %v1069, 0
      %v1151 = vsel %vm633, %v1070, 0
      %v1154 = vsel %vm633, %v1071, 0
      %v1157 = vsel %vm633, %v1072, 0
      %v1160 = vsel %vm633, %v1073, 0
      %v1163 = vsel %vm633, %v1074, 0
      %v1166 = vsel %vm633, %v1075, 0
      %v1169 = vsel %vm633, %v1076, 0
      %v1172 = vsel %vm633, %v1077, 0
      %v1175 = vsel %vm633, %v1078, 0
      %v1178 = vsel %vm633, %v1079, 0
      %v1181 = vsel %vm633, %v1080, 0
      %v1184 = vsel %vm633, %v1081, 0
      %1186 = vmatpush.bf16.msra.mxu0 0
      %1187 = vmatpush.bf16.msra.mxu0 0
      %1188 = vmatpush.bf16.msra.mxu0 0
      %1189 = vmatpush.bf16.msra.mxu0 0
      %1190 = vmatpush.bf16.msra.mxu0 %v1109
      %1191 = vmatpush.bf16.msra.mxu0 %v1108
      %1192 = vmatpush.bf16.msra.mxu0 %v1107
      %1193 = vmatpush.bf16.msra.mxu0 %v1106
      %1194 = vmatmul.bf16.gmra.mxu0 %v1115
      %v1195 = vpop.f32.mrf.mxu0
      %v1196 = vadd.f32 0.0, %v1195
      %v1197 = vpop.f32.mrf.mxu0
      %v1198 = vadd.f32 0.0, %v1197
      %1199 = vmatmul.bf16.gmra.mxu0 %v1118
      %v1200 = vpop.f32.mrf.mxu0
      %v1201 = vadd.f32 0.0, %v1200
      %v1202 = vpop.f32.mrf.mxu0
      %v1203 = vadd.f32 0.0, %v1202
      %1204 = vmatmul.bf16.gmra.mxu0 %v1121
      %v1205 = vpop.f32.mrf.mxu0
      %v1206 = vadd.f32 0.0, %v1205
      %v1207 = vpop.f32.mrf.mxu0
      %v1208 = vadd.f32 0.0, %v1207
      %1209 = vmatmul.bf16.gmra.mxu0 %v1124
      %v1210 = vpop.f32.mrf.mxu0
      %v1211 = vadd.f32 0.0, %v1210
      %v1212 = vpop.f32.mrf.mxu0
      %v1213 = vadd.f32 0.0, %v1212
      %1214 = vmatmul.bf16.gmra.mxu0 %v1127
      %v1215 = vpop.f32.mrf.mxu0
      %v1216 = vadd.f32 0.0, %v1215
      %v1217 = vpop.f32.mrf.mxu0
      %v1218 = vadd.f32 0.0, %v1217
      %1219 = vmatmul.bf16.gmra.mxu0 %v1130
      %v1220 = vpop.f32.mrf.mxu0
      %v1221 = vadd.f32 0.0, %v1220
      %v1222 = vpop.f32.mrf.mxu0
      %v1223 = vadd.f32 0.0, %v1222
      %1224 = vmatmul.bf16.gmra.mxu0 %v1133
      %v1225 = vpop.f32.mrf.mxu0
      %v1226 = vadd.f32 0.0, %v1225
      %v1227 = vpop.f32.mrf.mxu0
      %v1228 = vadd.f32 0.0, %v1227
      %1229 = vmatmul.bf16.gmra.mxu0 %v1136
      %v1230 = vpop.f32.mrf.mxu0
      %v1231 = vadd.f32 0.0, %v1230
      %v1232 = vpop.f32.mrf.mxu0
      %v1233 = vadd.f32 0.0, %v1232
      %1234 = vmatmul.bf16.gmra.mxu0 %v1139
      %v1235 = vpop.f32.mrf.mxu0
      %v1236 = vadd.f32 0.0, %v1235
      %v1237 = vpop.f32.mrf.mxu0
      %v1238 = vadd.f32 0.0, %v1237
      %1239 = vmatmul.bf16.gmra.mxu0 %v1142
      %v1240 = vpop.f32.mrf.mxu0
      %v1241 = vadd.f32 0.0, %v1240
      %v1242 = vpop.f32.mrf.mxu0
      %v1243 = vadd.f32 0.0, %v1242
      %1244 = vmatmul.bf16.gmra.mxu0 %v1145
      %v1245 = vpop.f32.mrf.mxu0
      %v1246 = vadd.f32 0.0, %v1245
      %v1247 = vpop.f32.mrf.mxu0
      %v1248 = vadd.f32 0.0, %v1247
      %1249 = vmatmul.bf16.gmra.mxu0 %v1148
      %v1250 = vpop.f32.mrf.mxu0
      %v1251 = vadd.f32 0.0, %v1250
      %v1252 = vpop.f32.mrf.mxu0
      %v1253 = vadd.f32 0.0, %v1252
      %1254 = vmatmul.bf16.gmra.mxu0 %v1151
      %v1255 = vpop.f32.mrf.mxu0
      %v1256 = vadd.f32 0.0, %v1255
      %v1257 = vpop.f32.mrf.mxu0
      %v1258 = vadd.f32 0.0, %v1257
      %1259 = vmatmul.bf16.gmra.mxu0 %v1154
      %v1260 = vpop.f32.mrf.mxu0
      %v1261 = vadd.f32 0.0, %v1260
      %v1262 = vpop.f32.mrf.mxu0
      %v1263 = vadd.f32 0.0, %v1262
      %1264 = vmatmul.bf16.gmra.mxu0 %v1157
      %v1265 = vpop.f32.mrf.mxu0
      %v1266 = vadd.f32 0.0, %v1265
      %v1267 = vpop.f32.mrf.mxu0
      %v1268 = vadd.f32 0.0, %v1267
      %1269 = vmatmul.bf16.gmra.mxu0 %v1160
      %v1270 = vpop.f32.mrf.mxu0
      %v1271 = vadd.f32 0.0, %v1270
      %v1272 = vpop.f32.mrf.mxu0
      %v1273 = vadd.f32 0.0, %v1272
      %1274 = vmatmul.bf16.gmra.mxu0 %v1163
      %v1275 = vpop.f32.mrf.mxu0
      %v1276 = vadd.f32 0.0, %v1275
      %v1277 = vpop.f32.mrf.mxu0
      %v1278 = vadd.f32 0.0, %v1277
      %1279 = vmatmul.bf16.gmra.mxu0 %v1166
      %v1280 = vpop.f32.mrf.mxu0
      %v1281 = vadd.f32 0.0, %v1280
      %v1282 = vpop.f32.mrf.mxu0
      %v1283 = vadd.f32 0.0, %v1282
      %1284 = vmatmul.bf16.gmra.mxu0 %v1169
      %v1285 = vpop.f32.mrf.mxu0
      %v1286 = vadd.f32 0.0, %v1285
      %v1287 = vpop.f32.mrf.mxu0
      %v1288 = vadd.f32 0.0, %v1287
      %1289 = vmatmul.bf16.gmra.mxu0 %v1172
      %v1290 = vpop.f32.mrf.mxu0
      %v1291 = vadd.f32 0.0, %v1290
      %v1292 = vpop.f32.mrf.mxu0
      %v1293 = vadd.f32 0.0, %v1292
      %1294 = vmatmul.bf16.gmra.mxu0 %v1175
      %v1295 = vpop.f32.mrf.mxu0
      %v1296 = vadd.f32 0.0, %v1295
      %v1297 = vpop.f32.mrf.mxu0
      %v1298 = vadd.f32 0.0, %v1297
      %1299 = vmatmul.bf16.gmra.mxu0 %v1178
      %v1300 = vpop.f32.mrf.mxu0
      %v1301 = vadd.f32 0.0, %v1300
      %v1302 = vpop.f32.mrf.mxu0
      %v1303 = vadd.f32 0.0, %v1302
      %1304 = vmatmul.bf16.gmra.mxu0 %v1181
      %v1305 = vpop.f32.mrf.mxu0
      %v1306 = vadd.f32 0.0, %v1305
      %v1307 = vpop.f32.mrf.mxu0
      %v1308 = vadd.f32 0.0, %v1307
      %1309 = vmatmul.bf16.gmra.mxu0 %v1184
      %v1310 = vpop.f32.mrf.mxu0
      %v1311 = vadd.f32 0.0, %v1310
      %v1312 = vpop.f32.mrf.mxu0
      %1313 = vdwg.mxu0
      %v1314 = vadd.f32 %v940, %v1196
      %v1315 = vadd.f32 %v942, %v1198
      %v1316 = vadd.f32 %v945, %v1201
      %v1317 = vadd.f32 %v947, %v1203
      %v1318 = vadd.f32 %v950, %v1206
      %v1319 = vadd.f32 %v952, %v1208
      %v1320 = vadd.f32 %v955, %v1211
      %v1321 = vadd.f32 %v957, %v1213
      %v1322 = vadd.f32 %v960, %v1216
      %v1323 = vadd.f32 %v962, %v1218
      %v1324 = vadd.f32 %v965, %v1221
      %v1325 = vadd.f32 %v967, %v1223
      %v1326 = vadd.f32 %v970, %v1226
      %v1327 = vadd.f32 %v972, %v1228
      %v1328 = vadd.f32 %v975, %v1231
      %v1329 = vadd.f32 %v977, %v1233
      %v1330 = vadd.f32 %v980, %v1236
      %v1331 = vadd.f32 %v982, %v1238
      %v1332 = vadd.f32 %v985, %v1241
      %v1333 = vadd.f32 %v987, %v1243
      %v1334 = vadd.f32 %v990, %v1246
      %v1335 = vadd.f32 %v992, %v1248
      %v1336 = vadd.f32 %v995, %v1251
      %v1337 = vadd.f32 %v997, %v1253
      %v1338 = vadd.f32 %v1000, %v1256
      %v1339 = vadd.f32 %v1002, %v1258
      %v1340 = vadd.f32 %v1005, %v1261
      %v1341 = vadd.f32 %v1007, %v1263
      %v1342 = vadd.f32 %v1010, %v1266
      %v1343 = vadd.f32 %v1012, %v1268
      %v1344 = vadd.f32 %v1015, %v1271
      %v1345 = vadd.f32 %v1017, %v1273
      %v1346 = vadd.f32 %v1020, %v1276
      %v1347 = vadd.f32 %v1022, %v1278
      %v1348 = vadd.f32 %v1025, %v1281
      %v1349 = vadd.f32 %v1027, %v1283
      %v1350 = vadd.f32 %v1030, %v1286
      %v1351 = vadd.f32 %v1032, %v1288
      %v1352 = vadd.f32 %v1035, %v1291
      %v1353 = vadd.f32 %v1037, %v1293
      %v1354 = vadd.f32 %v1040, %v1296
      %v1355 = vadd.f32 %v1042, %v1298
      %v1356 = vadd.f32 %v1045, %v1301
      %v1357 = vadd.f32 %v1047, %v1303
      %v1358 = vadd.f32 %v1050, %v1306
      %v1359 = vadd.f32 %v1052, %v1308
      %v1360 = vadd.f32 %v1055, %v1311
      %v1361 = vpack.c.bf16 %v277, %v276
      %v1362 = vpack.c.bf16 %v279, %v278
      %v1363 = vpack.c.bf16 %v281, %v280
      %v1364 = vpack.c.bf16 %v283, %v282
      %v1365 = vpack.c.bf16 %v285, %v284
      %v1366 = vpack.c.bf16 %v287, %v286
      %v1367 = vpack.c.bf16 %v289, %v288
      %v1368 = vpack.c.bf16 %v291, %v290
      %v1369 = vpack.c.bf16 %v293, %v292
      %v1370 = vpack.c.bf16 %v295, %v294
      %v1371 = vpack.c.bf16 %v297, %v296
      %v1372 = vpack.c.bf16 %v299, %v298
      %v1373 = vpack.c.bf16 %v301, %v300
      %v1374 = vpack.c.bf16 %v303, %v302
      %v1375 = vpack.c.bf16 %v305, %v304
      %v1376 = vpack.c.bf16 %v307, %v306
      %v1377 = vpack.c.bf16 %v309, %v308
      %v1378 = vpack.c.bf16 %v311, %v310
      %v1379 = vpack.c.bf16 %v313, %v312
      %v1380 = vpack.c.bf16 %v315, %v314
      %v1381 = vpack.c.bf16 %v317, %v316
      %v1382 = vpack.c.bf16 %v319, %v318
      %v1383 = vpack.c.bf16 %v321, %v320
      %v1384 = vpack.c.bf16 %v322, %v322
      %v1385 = vld [vmem:[%s2 + $0x60] sm:$0xf]
      %v1386 = vld [vmem:[%s2 + $0x64] sm:$0xf]
      %v1387 = vld [vmem:[%s2 + $0x68] sm:$0xf]
      %v1388 = vld [vmem:[%s2 + $0x6c] sm:$0xf]
      %v1389 = vld [vmem:[%s2 + $0x70] sm:$0xf]
      %v1390 = vld [vmem:[%s2 + $0x74] sm:$0xf]
      %v1391 = vld [vmem:[%s2 + $0x78] sm:$0xf]
      %v1392 = vld [vmem:[%s2 + $0x7c] sm:$0xf]
      %v1401 = vunpack.c.l.b16 %v1385
      %v1402 = vunpack.c.l.b16 %v1386
      %v1403 = vunpack.c.l.b16 %v1387
      %v1404 = vunpack.c.l.b16 %v1388
      %v1405 = vunpack.c.l.b16 %v1389
      %v1406 = vunpack.c.l.b16 %v1390
      %v1407 = vunpack.c.l.b16 %v1391
      %v1408 = vunpack.c.l.b16 %v1392
      %v1409 = vpack.c.b16 %v1402, %v1401
      %v1410 = vpack.c.b16 %v1404, %v1403
      %v1411 = vpack.c.b16 %v1406, %v1405
      %v1412 = vpack.c.b16 %v1408, %v1407
      %v1418 = vsel %vm633, %v1361, 0
      %v1421 = vsel %vm633, %v1362, 0
      %v1424 = vsel %vm633, %v1363, 0
      %v1427 = vsel %vm633, %v1364, 0
      %v1430 = vsel %vm633, %v1365, 0
      %v1433 = vsel %vm633, %v1366, 0
      %v1436 = vsel %vm633, %v1367, 0
      %v1439 = vsel %vm633, %v1368, 0
      %v1442 = vsel %vm633, %v1369, 0
      %v1445 = vsel %vm633, %v1370, 0
      %v1448 = vsel %vm633, %v1371, 0
      %v1451 = vsel %vm633, %v1372, 0
      %v1454 = vsel %vm633, %v1373, 0
      %v1457 = vsel %vm633, %v1374, 0
      %v1460 = vsel %vm633, %v1375, 0
      %v1463 = vsel %vm633, %v1376, 0
      %v1466 = vsel %vm633, %v1377, 0
      %v1469 = vsel %vm633, %v1378, 0
      %v1472 = vsel %vm633, %v1379, 0
      %v1475 = vsel %vm633, %v1380, 0
      %v1478 = vsel %vm633, %v1381, 0
      %v1481 = vsel %vm633, %v1382, 0
      %v1484 = vsel %vm633, %v1383, 0
      %v1487 = vsel %vm633, %v1384, 0
      %1489 = vmatpush.bf16.msra.mxu0 0
      %1490 = vmatpush.bf16.msra.mxu0 0
      %1491 = vmatpush.bf16.msra.mxu0 0
      %1492 = vmatpush.bf16.msra.mxu0 0
      %1493 = vmatpush.bf16.msra.mxu0 %v1412
      %1494 = vmatpush.bf16.msra.mxu0 %v1411
      %1495 = vmatpush.bf16.msra.mxu0 %v1410
      %1496 = vmatpush.bf16.msra.mxu0 %v1409
      %1497 = vmatmul.bf16.gmra.mxu0 %v1418
      %v1498 = vpop.f32.mrf.mxu0
      %v1499 = vadd.f32 0.0, %v1498
      %v1500 = vpop.f32.mrf.mxu0
      %v1501 = vadd.f32 0.0, %v1500
      %1502 = vmatmul.bf16.gmra.mxu0 %v1421
      %v1503 = vpop.f32.mrf.mxu0
      %v1504 = vadd.f32 0.0, %v1503
      %v1505 = vpop.f32.mrf.mxu0
      %v1506 = vadd.f32 0.0, %v1505
      %1507 = vmatmul.bf16.gmra.mxu0 %v1424
      %v1508 = vpop.f32.mrf.mxu0
      %v1509 = vadd.f32 0.0, %v1508
      %v1510 = vpop.f32.mrf.mxu0
      %v1511 = vadd.f32 0.0, %v1510
      %1512 = vmatmul.bf16.gmra.mxu0 %v1427
      %v1513 = vpop.f32.mrf.mxu0
      %v1514 = vadd.f32 0.0, %v1513
      %v1515 = vpop.f32.mrf.mxu0
      %v1516 = vadd.f32 0.0, %v1515
      %1517 = vmatmul.bf16.gmra.mxu0 %v1430
      %v1518 = vpop.f32.mrf.mxu0
      %v1519 = vadd.f32 0.0, %v1518
      %v1520 = vpop.f32.mrf.mxu0
      %v1521 = vadd.f32 0.0, %v1520
      %1522 = vmatmul.bf16.gmra.mxu0 %v1433
      %v1523 = vpop.f32.mrf.mxu0
      %v1524 = vadd.f32 0.0, %v1523
      %v1525 = vpop.f32.mrf.mxu0
      %v1526 = vadd.f32 0.0, %v1525
      %1527 = vmatmul.bf16.gmra.mxu0 %v1436
      %v1528 = vpop.f32.mrf.mxu0
      %v1529 = vadd.f32 0.0, %v1528
      %v1530 = vpop.f32.mrf.mxu0
      %v1531 = vadd.f32 0.0, %v1530
      %1532 = vmatmul.bf16.gmra.mxu0 %v1439
      %v1533 = vpop.f32.mrf.mxu0
      %v1534 = vadd.f32 0.0, %v1533
      %v1535 = vpop.f32.mrf.mxu0
      %v1536 = vadd.f32 0.0, %v1535
      %1537 = vmatmul.bf16.gmra.mxu0 %v1442
      %v1538 = vpop.f32.mrf.mxu0
      %v1539 = vadd.f32 0.0, %v1538
      %v1540 = vpop.f32.mrf.mxu0
      %v1541 = vadd.f32 0.0, %v1540
      %1542 = vmatmul.bf16.gmra.mxu0 %v1445
      %v1543 = vpop.f32.mrf.mxu0
      %v1544 = vadd.f32 0.0, %v1543
      %v1545 = vpop.f32.mrf.mxu0
      %v1546 = vadd.f32 0.0, %v1545
      %1547 = vmatmul.bf16.gmra.mxu0 %v1448
      %v1548 = vpop.f32.mrf.mxu0
      %v1549 = vadd.f32 0.0, %v1548
      %v1550 = vpop.f32.mrf.mxu0
      %v1551 = vadd.f32 0.0, %v1550
      %1552 = vmatmul.bf16.gmra.mxu0 %v1451
      %v1553 = vpop.f32.mrf.mxu0
      %v1554 = vadd.f32 0.0, %v1553
      %v1555 = vpop.f32.mrf.mxu0
      %v1556 = vadd.f32 0.0, %v1555
      %1557 = vmatmul.bf16.gmra.mxu0 %v1454
      %v1558 = vpop.f32.mrf.mxu0
      %v1559 = vadd.f32 0.0, %v1558
      %v1560 = vpop.f32.mrf.mxu0
      %v1561 = vadd.f32 0.0, %v1560
      %1562 = vmatmul.bf16.gmra.mxu0 %v1457
      %v1563 = vpop.f32.mrf.mxu0
      %v1564 = vadd.f32 0.0, %v1563
      %v1565 = vpop.f32.mrf.mxu0
      %v1566 = vadd.f32 0.0, %v1565
      %1567 = vmatmul.bf16.gmra.mxu0 %v1460
      %v1568 = vpop.f32.mrf.mxu0
      %v1569 = vadd.f32 0.0, %v1568
      %v1570 = vpop.f32.mrf.mxu0
      %v1571 = vadd.f32 0.0, %v1570
      %1572 = vmatmul.bf16.gmra.mxu0 %v1463
      %v1573 = vpop.f32.mrf.mxu0
      %v1574 = vadd.f32 0.0, %v1573
      %v1575 = vpop.f32.mrf.mxu0
      %v1576 = vadd.f32 0.0, %v1575
      %1577 = vmatmul.bf16.gmra.mxu0 %v1466
      %v1578 = vpop.f32.mrf.mxu0
      %v1579 = vadd.f32 0.0, %v1578
      %v1580 = vpop.f32.mrf.mxu0
      %v1581 = vadd.f32 0.0, %v1580
      %1582 = vmatmul.bf16.gmra.mxu0 %v1469
      %v1583 = vpop.f32.mrf.mxu0
      %v1584 = vadd.f32 0.0, %v1583
      %v1585 = vpop.f32.mrf.mxu0
      %v1586 = vadd.f32 0.0, %v1585
      %1587 = vmatmul.bf16.gmra.mxu0 %v1472
      %v1588 = vpop.f32.mrf.mxu0
      %v1589 = vadd.f32 0.0, %v1588
      %v1590 = vpop.f32.mrf.mxu0
      %v1591 = vadd.f32 0.0, %v1590
      %1592 = vmatmul.bf16.gmra.mxu0 %v1475
      %v1593 = vpop.f32.mrf.mxu0
      %v1594 = vadd.f32 0.0, %v1593
      %v1595 = vpop.f32.mrf.mxu0
      %v1596 = vadd.f32 0.0, %v1595
      %1597 = vmatmul.bf16.gmra.mxu0 %v1478
      %v1598 = vpop.f32.mrf.mxu0
      %v1599 = vadd.f32 0.0, %v1598
      %v1600 = vpop.f32.mrf.mxu0
      %v1601 = vadd.f32 0.0, %v1600
      %1602 = vmatmul.bf16.gmra.mxu0 %v1481
      %v1603 = vpop.f32.mrf.mxu0
      %v1604 = vadd.f32 0.0, %v1603
      %v1605 = vpop.f32.mrf.mxu0
      %v1606 = vadd.f32 0.0, %v1605
      %1607 = vmatmul.bf16.gmra.mxu0 %v1484
      %v1608 = vpop.f32.mrf.mxu0
      %v1609 = vadd.f32 0.0, %v1608
      %v1610 = vpop.f32.mrf.mxu0
      %v1611 = vadd.f32 0.0, %v1610
      %1612 = vmatmul.bf16.gmra.mxu0 %v1487
      %v1613 = vpop.f32.mrf.mxu0
      %v1614 = vadd.f32 0.0, %v1613
      %v1615 = vpop.f32.mrf.mxu0
      %1616 = vdwg.mxu0
      %v1617 = vadd.f32 %v1314, %v1499
      %v1618 = vadd.f32 %v1315, %v1501
      %v1619 = vadd.f32 %v1316, %v1504
      %v1620 = vadd.f32 %v1317, %v1506
      %v1621 = vadd.f32 %v1318, %v1509
      %v1622 = vadd.f32 %v1319, %v1511
      %v1623 = vadd.f32 %v1320, %v1514
      %v1624 = vadd.f32 %v1321, %v1516
      %v1625 = vadd.f32 %v1322, %v1519
      %v1626 = vadd.f32 %v1323, %v1521
      %v1627 = vadd.f32 %v1324, %v1524
      %v1628 = vadd.f32 %v1325, %v1526
      %v1629 = vadd.f32 %v1326, %v1529
      %v1630 = vadd.f32 %v1327, %v1531
      %v1631 = vadd.f32 %v1328, %v1534
      %v1632 = vadd.f32 %v1329, %v1536
      %v1633 = vadd.f32 %v1330, %v1539
      %v1634 = vadd.f32 %v1331, %v1541
      %v1635 = vadd.f32 %v1332, %v1544
      %v1636 = vadd.f32 %v1333, %v1546
      %v1637 = vadd.f32 %v1334, %v1549
      %v1638 = vadd.f32 %v1335, %v1551
      %v1639 = vadd.f32 %v1336, %v1554
      %v1640 = vadd.f32 %v1337, %v1556
      %v1641 = vadd.f32 %v1338, %v1559
      %v1642 = vadd.f32 %v1339, %v1561
      %v1643 = vadd.f32 %v1340, %v1564
      %v1644 = vadd.f32 %v1341, %v1566
      %v1645 = vadd.f32 %v1342, %v1569
      %v1646 = vadd.f32 %v1343, %v1571
      %v1647 = vadd.f32 %v1344, %v1574
      %v1648 = vadd.f32 %v1345, %v1576
      %v1649 = vadd.f32 %v1346, %v1579
      %v1650 = vadd.f32 %v1347, %v1581
      %v1651 = vadd.f32 %v1348, %v1584
      %v1652 = vadd.f32 %v1349, %v1586
      %v1653 = vadd.f32 %v1350, %v1589
      %v1654 = vadd.f32 %v1351, %v1591
      %v1655 = vadd.f32 %v1352, %v1594
      %v1656 = vadd.f32 %v1353, %v1596
      %v1657 = vadd.f32 %v1354, %v1599
      %v1658 = vadd.f32 %v1355, %v1601
      %v1659 = vadd.f32 %v1356, %v1604
      %v1660 = vadd.f32 %v1357, %v1606
      %v1661 = vadd.f32 %v1358, %v1609
      %v1662 = vadd.f32 %v1359, %v1611
      %v1663 = vadd.f32 %v1360, %v1614
      %v1664 = vpack.c.bf16 %v432, %v433
      %v1665 = vpack.c.bf16 %v430, %v431
      %v1666 = vpack.c.bf16 %v428, %v429
      %v1667 = vpack.c.bf16 %v426, %v427
      %v1668 = vpack.c.bf16 %v424, %v425
      %v1669 = vpack.c.bf16 %v422, %v423
      %v1670 = vpack.c.bf16 %v420, %v421
      %v1671 = vpack.c.bf16 %v418, %v419
      %v1672 = vpack.c.bf16 %v416, %v417
      %v1673 = vpack.c.bf16 %v414, %v415
      %v1674 = vpack.c.bf16 %v412, %v413
      %v1675 = vpack.c.bf16 %v410, %v411
      %v1676 = vpack.c.bf16 %v408, %v409
      %v1677 = vpack.c.bf16 %v406, %v407
      %v1678 = vpack.c.bf16 %v404, %v405
      %v1679 = vpack.c.bf16 %v402, %v403
      %v1680 = vpack.c.bf16 %v400, %v401
      %v1681 = vpack.c.bf16 %v398, %v399
      %v1682 = vpack.c.bf16 %v396, %v397
      %v1683 = vpack.c.bf16 %v394, %v395
      %v1684 = vpack.c.bf16 %v392, %v393
      %v1685 = vpack.c.bf16 %v390, %v391
      %v1686 = vpack.c.bf16 %v388, %v389
      %v1687 = vpack.c.bf16 %v387, %v387
      %v1688 = vld [vmem:[%s2 + $0x80] sm:$0xf]
      %v1689 = vld [vmem:[%s2 + $0x84] sm:$0xf]
      %v1690 = vld [vmem:[%s2 + $0x88] sm:$0xf]
      %v1691 = vld [vmem:[%s2 + $0x8c] sm:$0xf]
      %v1692 = vld [vmem:[%s2 + $0x90] sm:$0xf]
      %v1693 = vld [vmem:[%s2 + $0x94] sm:$0xf]
      %v1694 = vld [vmem:[%s2 + $0x98] sm:$0xf]
      %v1695 = vld [vmem:[%s2 + $0x9c] sm:$0xf]
      %v1704 = vunpack.c.l.b16 %v1688
      %v1705 = vunpack.c.l.b16 %v1689
      %v1706 = vunpack.c.l.b16 %v1690
      %v1707 = vunpack.c.l.b16 %v1691
      %v1708 = vunpack.c.l.b16 %v1692
      %v1709 = vunpack.c.l.b16 %v1693
      %v1710 = vunpack.c.l.b16 %v1694
      %v1711 = vunpack.c.l.b16 %v1695
      %v1712 = vpack.c.b16 %v1705, %v1704
      %v1713 = vpack.c.b16 %v1707, %v1706
      %v1714 = vpack.c.b16 %v1709, %v1708
      %v1715 = vpack.c.b16 %v1711, %v1710
      %v1721 = vsel %vm633, %v1664, 0
      %v1724 = vsel %vm633, %v1665, 0
      %v1727 = vsel %vm633, %v1666, 0
      %v1730 = vsel %vm633, %v1667, 0
      %v1733 = vsel %vm633, %v1668, 0
      %v1736 = vsel %vm633, %v1669, 0
      %v1739 = vsel %vm633, %v1670, 0
      %v1742 = vsel %vm633, %v1671, 0
      %v1745 = vsel %vm633, %v1672, 0
      %v1748 = vsel %vm633, %v1673, 0
      %v1751 = vsel %vm633, %v1674, 0
      %v1754 = vsel %vm633, %v1675, 0
      %v1757 = vsel %vm633, %v1676, 0
      %v1760 = vsel %vm633, %v1677, 0
      %v1763 = vsel %vm633, %v1678, 0
      %v1766 = vsel %vm633, %v1679, 0
      %v1769 = vsel %vm633, %v1680, 0
      %v1772 = vsel %vm633, %v1681, 0
      %v1775 = vsel %vm633, %v1682, 0
      %v1778 = vsel %vm633, %v1683, 0
      %v1781 = vsel %vm633, %v1684, 0
      %v1784 = vsel %vm633, %v1685, 0
      %v1787 = vsel %vm633, %v1686, 0
      %v1790 = vsel %vm633, %v1687, 0
      %1792 = vmatpush.bf16.msra.mxu0 0
      %1793 = vmatpush.bf16.msra.mxu0 0
      %1794 = vmatpush.bf16.msra.mxu0 0
      %1795 = vmatpush.bf16.msra.mxu0 0
      %1796 = vmatpush.bf16.msra.mxu0 %v1715
      %1797 = vmatpush.bf16.msra.mxu0 %v1714
      %1798 = vmatpush.bf16.msra.mxu0 %v1713
      %1799 = vmatpush.bf16.msra.mxu0 %v1712
      %1800 = vmatmul.bf16.gmra.mxu0 %v1721
      %v1801 = vpop.f32.mrf.mxu0
      %v1802 = vadd.f32 0.0, %v1801
      %v1803 = vpop.f32.mrf.mxu0
      %v1804 = vadd.f32 0.0, %v1803
      %1805 = vmatmul.bf16.gmra.mxu0 %v1724
      %v1806 = vpop.f32.mrf.mxu0
      %v1807 = vadd.f32 0.0, %v1806
      %v1808 = vpop.f32.mrf.mxu0
      %v1809 = vadd.f32 0.0, %v1808
      %1810 = vmatmul.bf16.gmra.mxu0 %v1727
      %v1811 = vpop.f32.mrf.mxu0
      %v1812 = vadd.f32 0.0, %v1811
      %v1813 = vpop.f32.mrf.mxu0
      %v1814 = vadd.f32 0.0, %v1813
      %1815 = vmatmul.bf16.gmra.mxu0 %v1730
      %v1816 = vpop.f32.mrf.mxu0
      %v1817 = vadd.f32 0.0, %v1816
      %v1818 = vpop.f32.mrf.mxu0
      %v1819 = vadd.f32 0.0, %v1818
      %1820 = vmatmul.bf16.gmra.mxu0 %v1733
      %v1821 = vpop.f32.mrf.mxu0
      %v1822 = vadd.f32 0.0, %v1821
      %v1823 = vpop.f32.mrf.mxu0
      %v1824 = vadd.f32 0.0, %v1823
      %1825 = vmatmul.bf16.gmra.mxu0 %v1736
      %v1826 = vpop.f32.mrf.mxu0
      %v1827 = vadd.f32 0.0, %v1826
      %v1828 = vpop.f32.mrf.mxu0
      %v1829 = vadd.f32 0.0, %v1828
      %1830 = vmatmul.bf16.gmra.mxu0 %v1739
      %v1831 = vpop.f32.mrf.mxu0
      %v1832 = vadd.f32 0.0, %v1831
      %v1833 = vpop.f32.mrf.mxu0
      %v1834 = vadd.f32 0.0, %v1833
      %1835 = vmatmul.bf16.gmra.mxu0 %v1742
      %v1836 = vpop.f32.mrf.mxu0
      %v1837 = vadd.f32 0.0, %v1836
      %v1838 = vpop.f32.mrf.mxu0
      %v1839 = vadd.f32 0.0, %v1838
      %1840 = vmatmul.bf16.gmra.mxu0 %v1745
      %v1841 = vpop.f32.mrf.mxu0
      %v1842 = vadd.f32 0.0, %v1841
      %v1843 = vpop.f32.mrf.mxu0
      %v1844 = vadd.f32 0.0, %v1843
      %1845 = vmatmul.bf16.gmra.mxu0 %v1748
      %v1846 = vpop.f32.mrf.mxu0
      %v1847 = vadd.f32 0.0, %v1846
      %v1848 = vpop.f32.mrf.mxu0
      %v1849 = vadd.f32 0.0, %v1848
      %1850 = vmatmul.bf16.gmra.mxu0 %v1751
      %v1851 = vpop.f32.mrf.mxu0
      %v1852 = vadd.f32 0.0, %v1851
      %v1853 = vpop.f32.mrf.mxu0
      %v1854 = vadd.f32 0.0, %v1853
      %1855 = vmatmul.bf16.gmra.mxu0 %v1754
      %v1856 = vpop.f32.mrf.mxu0
      %v1857 = vadd.f32 0.0, %v1856
      %v1858 = vpop.f32.mrf.mxu0
      %v1859 = vadd.f32 0.0, %v1858
      %1860 = vmatmul.bf16.gmra.mxu0 %v1757
      %v1861 = vpop.f32.mrf.mxu0
      %v1862 = vadd.f32 0.0, %v1861
      %v1863 = vpop.f32.mrf.mxu0
      %v1864 = vadd.f32 0.0, %v1863
      %1865 = vmatmul.bf16.gmra.mxu0 %v1760
      %v1866 = vpop.f32.mrf.mxu0
      %v1867 = vadd.f32 0.0, %v1866
      %v1868 = vpop.f32.mrf.mxu0
      %v1869 = vadd.f32 0.0, %v1868
      %1870 = vmatmul.bf16.gmra.mxu0 %v1763
      %v1871 = vpop.f32.mrf.mxu0
      %v1872 = vadd.f32 0.0, %v1871
      %v1873 = vpop.f32.mrf.mxu0
      %v1874 = vadd.f32 0.0, %v1873
      %1875 = vmatmul.bf16.gmra.mxu0 %v1766
      %v1876 = vpop.f32.mrf.mxu0
      %v1877 = vadd.f32 0.0, %v1876
      %v1878 = vpop.f32.mrf.mxu0
      %v1879 = vadd.f32 0.0, %v1878
      %1880 = vmatmul.bf16.gmra.mxu0 %v1769
      %v1881 = vpop.f32.mrf.mxu0
      %v1882 = vadd.f32 0.0, %v1881
      %v1883 = vpop.f32.mrf.mxu0
      %v1884 = vadd.f32 0.0, %v1883
      %1885 = vmatmul.bf16.gmra.mxu0 %v1772
      %v1886 = vpop.f32.mrf.mxu0
      %v1887 = vadd.f32 0.0, %v1886
      %v1888 = vpop.f32.mrf.mxu0
      %v1889 = vadd.f32 0.0, %v1888
      %1890 = vmatmul.bf16.gmra.mxu0 %v1775
      %v1891 = vpop.f32.mrf.mxu0
      %v1892 = vadd.f32 0.0, %v1891
      %v1893 = vpop.f32.mrf.mxu0
      %v1894 = vadd.f32 0.0, %v1893
      %1895 = vmatmul.bf16.gmra.mxu0 %v1778
      %v1896 = vpop.f32.mrf.mxu0
      %v1897 = vadd.f32 0.0, %v1896
      %v1898 = vpop.f32.mrf.mxu0
      %v1899 = vadd.f32 0.0, %v1898
      %1900 = vmatmul.bf16.gmra.mxu0 %v1781
      %v1901 = vpop.f32.mrf.mxu0
      %v1902 = vadd.f32 0.0, %v1901
      %v1903 = vpop.f32.mrf.mxu0
      %v1904 = vadd.f32 0.0, %v1903
      %1905 = vmatmul.bf16.gmra.mxu0 %v1784
      %v1906 = vpop.f32.mrf.mxu0
      %v1907 = vadd.f32 0.0, %v1906
      %v1908 = vpop.f32.mrf.mxu0
      %v1909 = vadd.f32 0.0, %v1908
      %1910 = vmatmul.bf16.gmra.mxu0 %v1787
      %v1911 = vpop.f32.mrf.mxu0
      %v1912 = vadd.f32 0.0, %v1911
      %v1913 = vpop.f32.mrf.mxu0
      %v1914 = vadd.f32 0.0, %v1913
      %1915 = vmatmul.bf16.gmra.mxu0 %v1790
      %v1916 = vpop.f32.mrf.mxu0
      %v1917 = vadd.f32 0.0, %v1916
      %v1918 = vpop.f32.mrf.mxu0
      %1919 = vdwg.mxu0
      %v1920 = vadd.f32 %v1617, %v1802
      %v1921 = vadd.f32 %v1618, %v1804
      %v1922 = vadd.f32 %v1619, %v1807
      %v1923 = vadd.f32 %v1620, %v1809
      %v1924 = vadd.f32 %v1621, %v1812
      %v1925 = vadd.f32 %v1622, %v1814
      %v1926 = vadd.f32 %v1623, %v1817
      %v1927 = vadd.f32 %v1624, %v1819
      %v1928 = vadd.f32 %v1625, %v1822
      %v1929 = vadd.f32 %v1626, %v1824
      %v1930 = vadd.f32 %v1627, %v1827
      %v1931 = vadd.f32 %v1628, %v1829
      %v1932 = vadd.f32 %v1629, %v1832
      %v1933 = vadd.f32 %v1630, %v1834
      %v1934 = vadd.f32 %v1631, %v1837
      %v1935 = vadd.f32 %v1632, %v1839
      %v1936 = vadd.f32 %v1633, %v1842
      %v1937 = vadd.f32 %v1634, %v1844
      %v1938 = vadd.f32 %v1635, %v1847
      %v1939 = vadd.f32 %v1636, %v1849
      %v1940 = vadd.f32 %v1637, %v1852
      %v1941 = vadd.f32 %v1638, %v1854
      %v1942 = vadd.f32 %v1639, %v1857
      %v1943 = vadd.f32 %v1640, %v1859
      %v1944 = vadd.f32 %v1641, %v1862
      %v1945 = vadd.f32 %v1642, %v1864
      %v1946 = vadd.f32 %v1643, %v1867
      %v1947 = vadd.f32 %v1644, %v1869
      %v1948 = vadd.f32 %v1645, %v1872
      %v1949 = vadd.f32 %v1646, %v1874
      %v1950 = vadd.f32 %v1647, %v1877
      %v1951 = vadd.f32 %v1648, %v1879
      %v1952 = vadd.f32 %v1649, %v1882
      %v1953 = vadd.f32 %v1650, %v1884
      %v1954 = vadd.f32 %v1651, %v1887
      %v1955 = vadd.f32 %v1652, %v1889
      %v1956 = vadd.f32 %v1653, %v1892
      %v1957 = vadd.f32 %v1654, %v1894
      %v1958 = vadd.f32 %v1655, %v1897
      %v1959 = vadd.f32 %v1656, %v1899
      %v1960 = vadd.f32 %v1657, %v1902
      %v1961 = vadd.f32 %v1658, %v1904
      %v1962 = vadd.f32 %v1659, %v1907
      %v1963 = vadd.f32 %v1660, %v1909
      %v1964 = vadd.f32 %v1661, %v1912
      %v1965 = vadd.f32 %v1662, %v1914
      %v1966 = vadd.f32 %v1663, %v1917
      %v1967 = vpack.c.bf16 %v540, %v541
      %v1968 = vpack.c.bf16 %v538, %v539
      %v1969 = vpack.c.bf16 %v536, %v537
      %v1970 = vpack.c.bf16 %v534, %v535
      %v1971 = vpack.c.bf16 %v532, %v533
      %v1972 = vpack.c.bf16 %v530, %v531
      %v1973 = vpack.c.bf16 %v528, %v529
      %v1974 = vpack.c.bf16 %v526, %v527
      %v1975 = vpack.c.bf16 %v524, %v525
      %v1976 = vpack.c.bf16 %v522, %v523
      %v1977 = vpack.c.bf16 %v520, %v521
      %v1978 = vpack.c.bf16 %v518, %v519
      %v1979 = vpack.c.bf16 %v516, %v517
      %v1980 = vpack.c.bf16 %v514, %v515
      %v1981 = vpack.c.bf16 %v512, %v513
      %v1982 = vpack.c.bf16 %v510, %v511
      %v1983 = vpack.c.bf16 %v508, %v509
      %v1984 = vpack.c.bf16 %v506, %v507
      %v1985 = vpack.c.bf16 %v504, %v505
      %v1986 = vpack.c.bf16 %v502, %v503
      %v1987 = vpack.c.bf16 %v500, %v501
      %v1988 = vpack.c.bf16 %v498, %v499
      %v1989 = vpack.c.bf16 %v496, %v497
      %v1990 = vpack.c.bf16 %v495, %v495
      %v1991 = vld [vmem:[%s2 + $0xa0] sm:$0xf]
      %v1992 = vld [vmem:[%s2 + $0xa4] sm:$0xf]
      %v1993 = vld [vmem:[%s2 + $0xa8] sm:$0xf]
      %v1994 = vld [vmem:[%s2 + $0xac] sm:$0xf]
      %v1995 = vld [vmem:[%s2 + $0xb0] sm:$0xf]
      %v1996 = vld [vmem:[%s2 + $0xb4] sm:$0xf]
      %v1997 = vld [vmem:[%s2 + $0xb8] sm:$0xf]
      %v1998 = vld [vmem:[%s2 + $0xbc] sm:$0xf]
      %v2007 = vunpack.c.l.b16 %v1991
      %v2008 = vunpack.c.l.b16 %v1992
      %v2009 = vunpack.c.l.b16 %v1993
      %v2010 = vunpack.c.l.b16 %v1994
      %v2011 = vunpack.c.l.b16 %v1995
      %v2012 = vunpack.c.l.b16 %v1996
      %v2013 = vunpack.c.l.b16 %v1997
      %v2014 = vunpack.c.l.b16 %v1998
      %v2015 = vpack.c.b16 %v2008, %v2007
      %v2016 = vpack.c.b16 %v2010, %v2009
      %v2017 = vpack.c.b16 %v2012, %v2011
      %v2018 = vpack.c.b16 %v2014, %v2013
      %v2024 = vsel %vm633, %v1967, 0
      %v2027 = vsel %vm633, %v1968, 0
      %v2030 = vsel %vm633, %v1969, 0
      %v2033 = vsel %vm633, %v1970, 0
      %v2036 = vsel %vm633, %v1971, 0
      %v2039 = vsel %vm633, %v1972, 0
      %v2042 = vsel %vm633, %v1973, 0
      %v2045 = vsel %vm633, %v1974, 0
      %v2048 = vsel %vm633, %v1975, 0
      %v2051 = vsel %vm633, %v1976, 0
      %v2054 = vsel %vm633, %v1977, 0
      %v2057 = vsel %vm633, %v1978, 0
      %v2060 = vsel %vm633, %v1979, 0
      %v2063 = vsel %vm633, %v1980, 0
      %v2066 = vsel %vm633, %v1981, 0
      %v2069 = vsel %vm633, %v1982, 0
      %v2072 = vsel %vm633, %v1983, 0
      %v2075 = vsel %vm633, %v1984, 0
      %v2078 = vsel %vm633, %v1985, 0
      %v2081 = vsel %vm633, %v1986, 0
      %v2084 = vsel %vm633, %v1987, 0
      %v2087 = vsel %vm633, %v1988, 0
      %v2090 = vsel %vm633, %v1989, 0
      %v2093 = vsel %vm633, %v1990, 0
      %2095 = vmatpush.bf16.msra.mxu0 0
      %2096 = vmatpush.bf16.msra.mxu0 0
      %2097 = vmatpush.bf16.msra.mxu0 0
      %2098 = vmatpush.bf16.msra.mxu0 0
      %2099 = vmatpush.bf16.msra.mxu0 %v2018
      %2100 = vmatpush.bf16.msra.mxu0 %v2017
      %2101 = vmatpush.bf16.msra.mxu0 %v2016
      %2102 = vmatpush.bf16.msra.mxu0 %v2015
      %2103 = vmatmul.bf16.gmra.mxu0 %v2024
      %v2104 = vpop.f32.mrf.mxu0
      %v2105 = vadd.f32 0.0, %v2104
      %v2106 = vpop.f32.mrf.mxu0
      %v2107 = vadd.f32 0.0, %v2106
      %2108 = vmatmul.bf16.gmra.mxu0 %v2027
      %v2109 = vpop.f32.mrf.mxu0
      %v2110 = vadd.f32 0.0, %v2109
      %v2111 = vpop.f32.mrf.mxu0
      %v2112 = vadd.f32 0.0, %v2111
      %2113 = vmatmul.bf16.gmra.mxu0 %v2030
      %v2114 = vpop.f32.mrf.mxu0
      %v2115 = vadd.f32 0.0, %v2114
      %v2116 = vpop.f32.mrf.mxu0
      %v2117 = vadd.f32 0.0, %v2116
      %2118 = vmatmul.bf16.gmra.mxu0 %v2033
      %v2119 = vpop.f32.mrf.mxu0
      %v2120 = vadd.f32 0.0, %v2119
      %v2121 = vpop.f32.mrf.mxu0
      %v2122 = vadd.f32 0.0, %v2121
      %2123 = vmatmul.bf16.gmra.mxu0 %v2036
      %v2124 = vpop.f32.mrf.mxu0
      %v2125 = vadd.f32 0.0, %v2124
      %v2126 = vpop.f32.mrf.mxu0
      %v2127 = vadd.f32 0.0, %v2126
      %2128 = vmatmul.bf16.gmra.mxu0 %v2039
      %v2129 = vpop.f32.mrf.mxu0
      %v2130 = vadd.f32 0.0, %v2129
      %v2131 = vpop.f32.mrf.mxu0
      %v2132 = vadd.f32 0.0, %v2131
      %2133 = vmatmul.bf16.gmra.mxu0 %v2042
      %v2134 = vpop.f32.mrf.mxu0
      %v2135 = vadd.f32 0.0, %v2134
      %v2136 = vpop.f32.mrf.mxu0
      %v2137 = vadd.f32 0.0, %v2136
      %2138 = vmatmul.bf16.gmra.mxu0 %v2045
      %v2139 = vpop.f32.mrf.mxu0
      %v2140 = vadd.f32 0.0, %v2139
      %v2141 = vpop.f32.mrf.mxu0
      %v2142 = vadd.f32 0.0, %v2141
      %2143 = vmatmul.bf16.gmra.mxu0 %v2048
      %v2144 = vpop.f32.mrf.mxu0
      %v2145 = vadd.f32 0.0, %v2144
      %v2146 = vpop.f32.mrf.mxu0
      %v2147 = vadd.f32 0.0, %v2146
      %2148 = vmatmul.bf16.gmra.mxu0 %v2051
      %v2149 = vpop.f32.mrf.mxu0
      %v2150 = vadd.f32 0.0, %v2149
      %v2151 = vpop.f32.mrf.mxu0
      %v2152 = vadd.f32 0.0, %v2151
      %2153 = vmatmul.bf16.gmra.mxu0 %v2054
      %v2154 = vpop.f32.mrf.mxu0
      %v2155 = vadd.f32 0.0, %v2154
      %v2156 = vpop.f32.mrf.mxu0
      %v2157 = vadd.f32 0.0, %v2156
      %2158 = vmatmul.bf16.gmra.mxu0 %v2057
      %v2159 = vpop.f32.mrf.mxu0
      %v2160 = vadd.f32 0.0, %v2159
      %v2161 = vpop.f32.mrf.mxu0
      %v2162 = vadd.f32 0.0, %v2161
      %2163 = vmatmul.bf16.gmra.mxu0 %v2060
      %v2164 = vpop.f32.mrf.mxu0
      %v2165 = vadd.f32 0.0, %v2164
      %v2166 = vpop.f32.mrf.mxu0
      %v2167 = vadd.f32 0.0, %v2166
      %2168 = vmatmul.bf16.gmra.mxu0 %v2063
      %v2169 = vpop.f32.mrf.mxu0
      %v2170 = vadd.f32 0.0, %v2169
      %v2171 = vpop.f32.mrf.mxu0
      %v2172 = vadd.f32 0.0, %v2171
      %2173 = vmatmul.bf16.gmra.mxu0 %v2066
      %v2174 = vpop.f32.mrf.mxu0
      %v2175 = vadd.f32 0.0, %v2174
      %v2176 = vpop.f32.mrf.mxu0
      %v2177 = vadd.f32 0.0, %v2176
      %2178 = vmatmul.bf16.gmra.mxu0 %v2069
      %v2179 = vpop.f32.mrf.mxu0
      %v2180 = vadd.f32 0.0, %v2179
      %v2181 = vpop.f32.mrf.mxu0
      %v2182 = vadd.f32 0.0, %v2181
      %2183 = vmatmul.bf16.gmra.mxu0 %v2072
      %v2184 = vpop.f32.mrf.mxu0
      %v2185 = vadd.f32 0.0, %v2184
      %v2186 = vpop.f32.mrf.mxu0
      %v2187 = vadd.f32 0.0, %v2186
      %2188 = vmatmul.bf16.gmra.mxu0 %v2075
      %v2189 = vpop.f32.mrf.mxu0
      %v2190 = vadd.f32 0.0, %v2189
      %v2191 = vpop.f32.mrf.mxu0
      %v2192 = vadd.f32 0.0, %v2191
      %2193 = vmatmul.bf16.gmra.mxu0 %v2078
      %v2194 = vpop.f32.mrf.mxu0
      %v2195 = vadd.f32 0.0, %v2194
      %v2196 = vpop.f32.mrf.mxu0
      %v2197 = vadd.f32 0.0, %v2196
      %2198 = vmatmul.bf16.gmra.mxu0 %v2081
      %v2199 = vpop.f32.mrf.mxu0
      %v2200 = vadd.f32 0.0, %v2199
      %v2201 = vpop.f32.mrf.mxu0
      %v2202 = vadd.f32 0.0, %v2201
      %2203 = vmatmul.bf16.gmra.mxu0 %v2084
      %v2204 = vpop.f32.mrf.mxu0
      %v2205 = vadd.f32 0.0, %v2204
      %v2206 = vpop.f32.mrf.mxu0
      %v2207 = vadd.f32 0.0, %v2206
      %2208 = vmatmul.bf16.gmra.mxu0 %v2087
      %v2209 = vpop.f32.mrf.mxu0
      %v2210 = vadd.f32 0.0, %v2209
      %v2211 = vpop.f32.mrf.mxu0
      %v2212 = vadd.f32 0.0, %v2211
      %2213 = vmatmul.bf16.gmra.mxu0 %v2090
      %v2214 = vpop.f32.mrf.mxu0
      %v2215 = vadd.f32 0.0, %v2214
      %v2216 = vpop.f32.mrf.mxu0
      %v2217 = vadd.f32 0.0, %v2216
      %2218 = vmatmul.bf16.gmra.mxu0 %v2093
      %v2219 = vpop.f32.mrf.mxu0
      %v2220 = vadd.f32 0.0, %v2219
      %v2221 = vpop.f32.mrf.mxu0
      %2222 = vdwg.mxu0
      %v2223 = vadd.f32 %v1920, %v2105
      %v2224 = vadd.f32 %v1921, %v2107
      %v2225 = vadd.f32 %v1922, %v2110
      %v2226 = vadd.f32 %v1923, %v2112
      %v2227 = vadd.f32 %v1924, %v2115
      %v2228 = vadd.f32 %v1925, %v2117
      %v2229 = vadd.f32 %v1926, %v2120
      %v2230 = vadd.f32 %v1927, %v2122
      %v2231 = vadd.f32 %v1928, %v2125
      %v2232 = vadd.f32 %v1929, %v2127
      %v2233 = vadd.f32 %v1930, %v2130
      %v2234 = vadd.f32 %v1931, %v2132
      %v2235 = vadd.f32 %v1932, %v2135
      %v2236 = vadd.f32 %v1933, %v2137
      %v2237 = vadd.f32 %v1934, %v2140
      %v2238 = vadd.f32 %v1935, %v2142
      %v2239 = vadd.f32 %v1936, %v2145
      %v2240 = vadd.f32 %v1937, %v2147
      %v2241 = vadd.f32 %v1938, %v2150
      %v2242 = vadd.f32 %v1939, %v2152
      %v2243 = vadd.f32 %v1940, %v2155
      %v2244 = vadd.f32 %v1941, %v2157
      %v2245 = vadd.f32 %v1942, %v2160
      %v2246 = vadd.f32 %v1943, %v2162
      %v2247 = vadd.f32 %v1944, %v2165
      %v2248 = vadd.f32 %v1945, %v2167
      %v2249 = vadd.f32 %v1946, %v2170
      %v2250 = vadd.f32 %v1947, %v2172
      %v2251 = vadd.f32 %v1948, %v2175
      %v2252 = vadd.f32 %v1949, %v2177
      %v2253 = vadd.f32 %v1950, %v2180
      %v2254 = vadd.f32 %v1951, %v2182
      %v2255 = vadd.f32 %v1952, %v2185
      %v2256 = vadd.f32 %v1953, %v2187
      %v2257 = vadd.f32 %v1954, %v2190
      %v2258 = vadd.f32 %v1955, %v2192
      %v2259 = vadd.f32 %v1956, %v2195
      %v2260 = vadd.f32 %v1957, %v2197
      %v2261 = vadd.f32 %v1958, %v2200
      %v2262 = vadd.f32 %v1959, %v2202
      %v2263 = vadd.f32 %v1960, %v2205
      %v2264 = vadd.f32 %v1961, %v2207
      %v2265 = vadd.f32 %v1962, %v2210
      %v2266 = vadd.f32 %v1963, %v2212
      %v2267 = vadd.f32 %v1964, %v2215
      %v2268 = vadd.f32 %v1965, %v2217
      %v2269 = vadd.f32 %v1966, %v2220
      %v2270 = vpack.c.bf16 %v320, %v319
      %v2271 = vpack.c.bf16 %v322, %v321
      %v2272 = vpack.c.bf16 %v324, %v323
      %v2273 = vpack.c.bf16 %v325, %v325
      %v2274 = vld [vmem:[%s2 + $0xc0] sm:$0xf]
      %v2275 = vld [vmem:[%s2 + $0xc4] sm:$0xf]
      %v2276 = vld [vmem:[%s2 + $0xc8] sm:$0xf]
      %v2277 = vld [vmem:[%s2 + $0xcc] sm:$0xf]
      %v2278 = vld [vmem:[%s2 + $0xd0] sm:$0xf]
      %v2279 = vld [vmem:[%s2 + $0xd4] sm:$0xf]
      %v2280 = vld [vmem:[%s2 + $0xd8] sm:$0xf]
      %v2281 = vld [vmem:[%s2 + $0xdc] sm:$0xf]
      %v2290 = vunpack.c.l.b16 %v2274
      %v2291 = vunpack.c.l.b16 %v2275
      %v2292 = vunpack.c.l.b16 %v2276
      %v2293 = vunpack.c.l.b16 %v2277
      %v2294 = vunpack.c.l.b16 %v2278
      %v2295 = vunpack.c.l.b16 %v2279
      %v2296 = vunpack.c.l.b16 %v2280
      %v2297 = vunpack.c.l.b16 %v2281
      %v2298 = vpack.c.b16 %v2291, %v2290
      %v2299 = vpack.c.b16 %v2293, %v2292
      %v2300 = vpack.c.b16 %v2295, %v2294
      %v2301 = vpack.c.b16 %v2297, %v2296
      %v2307 = vsel %vm633, %v2270, 0
      %v2310 = vsel %vm633, %v2271, 0
      %v2313 = vsel %vm633, %v2272, 0
      %v2316 = vsel %vm633, %v2273, 0
      %2318 = vmatpush.bf16.msra.mxu0 0
      %2319 = vmatpush.bf16.msra.mxu0 0
      %2320 = vmatpush.bf16.msra.mxu0 0
      %2321 = vmatpush.bf16.msra.mxu0 0
      %2322 = vmatpush.bf16.msra.mxu0 %v2301
      %2323 = vmatpush.bf16.msra.mxu0 %v2300
      %2324 = vmatpush.bf16.msra.mxu0 %v2299
      %2325 = vmatpush.bf16.msra.mxu0 %v2298
      %2326 = vmatmul.bf16.gmra.mxu0 %v868
      %v2327 = vpop.f32.mrf.mxu0
      %v2328 = vadd.f32 0.0, %v2327
      %v2329 = vpop.f32.mrf.mxu0
      %v2330 = vadd.f32 0.0, %v2329
      %2331 = vmatmul.bf16.gmra.mxu0 %v871
      %v2332 = vpop.f32.mrf.mxu0
      %v2333 = vadd.f32 0.0, %v2332
      %v2334 = vpop.f32.mrf.mxu0
      %v2335 = vadd.f32 0.0, %v2334
      %2336 = vmatmul.bf16.gmra.mxu0 %v874
      %v2337 = vpop.f32.mrf.mxu0
      %v2338 = vadd.f32 0.0, %v2337
      %v2339 = vpop.f32.mrf.mxu0
      %v2340 = vadd.f32 0.0, %v2339
      %2341 = vmatmul.bf16.gmra.mxu0 %v877
      %v2342 = vpop.f32.mrf.mxu0
      %v2343 = vadd.f32 0.0, %v2342
      %v2344 = vpop.f32.mrf.mxu0
      %v2345 = vadd.f32 0.0, %v2344
      %2346 = vmatmul.bf16.gmra.mxu0 %v880
      %v2347 = vpop.f32.mrf.mxu0
      %v2348 = vadd.f32 0.0, %v2347
      %v2349 = vpop.f32.mrf.mxu0
      %v2350 = vadd.f32 0.0, %v2349
      %2351 = vmatmul.bf16.gmra.mxu0 %v883
      %v2352 = vpop.f32.mrf.mxu0
      %v2353 = vadd.f32 0.0, %v2352
      %v2354 = vpop.f32.mrf.mxu0
      %v2355 = vadd.f32 0.0, %v2354
      %2356 = vmatmul.bf16.gmra.mxu0 %v886
      %v2357 = vpop.f32.mrf.mxu0
      %v2358 = vadd.f32 0.0, %v2357
      %v2359 = vpop.f32.mrf.mxu0
      %v2360 = vadd.f32 0.0, %v2359
      %2361 = vmatmul.bf16.gmra.mxu0 %v889
      %v2362 = vpop.f32.mrf.mxu0
      %v2363 = vadd.f32 0.0, %v2362
      %v2364 = vpop.f32.mrf.mxu0
      %v2365 = vadd.f32 0.0, %v2364
      %2366 = vmatmul.bf16.gmra.mxu0 %v892
      %v2367 = vpop.f32.mrf.mxu0
      %v2368 = vadd.f32 0.0, %v2367
      %v2369 = vpop.f32.mrf.mxu0
      %v2370 = vadd.f32 0.0, %v2369
      %2371 = vmatmul.bf16.gmra.mxu0 %v895
      %v2372 = vpop.f32.mrf.mxu0
      %v2373 = vadd.f32 0.0, %v2372
      %v2374 = vpop.f32.mrf.mxu0
      %v2375 = vadd.f32 0.0, %v2374
      %2376 = vmatmul.bf16.gmra.mxu0 %v898
      %v2377 = vpop.f32.mrf.mxu0
      %v2378 = vadd.f32 0.0, %v2377
      %v2379 = vpop.f32.mrf.mxu0
      %v2380 = vadd.f32 0.0, %v2379
      %2381 = vmatmul.bf16.gmra.mxu0 %v901
      %v2382 = vpop.f32.mrf.mxu0
      %v2383 = vadd.f32 0.0, %v2382
      %v2384 = vpop.f32.mrf.mxu0
      %v2385 = vadd.f32 0.0, %v2384
      %2386 = vmatmul.bf16.gmra.mxu0 %v904
      %v2387 = vpop.f32.mrf.mxu0
      %v2388 = vadd.f32 0.0, %v2387
      %v2389 = vpop.f32.mrf.mxu0
      %v2390 = vadd.f32 0.0, %v2389
      %2391 = vmatmul.bf16.gmra.mxu0 %v907
      %v2392 = vpop.f32.mrf.mxu0
      %v2393 = vadd.f32 0.0, %v2392
      %v2394 = vpop.f32.mrf.mxu0
      %v2395 = vadd.f32 0.0, %v2394
      %2396 = vmatmul.bf16.gmra.mxu0 %v910
      %v2397 = vpop.f32.mrf.mxu0
      %v2398 = vadd.f32 0.0, %v2397
      %v2399 = vpop.f32.mrf.mxu0
      %v2400 = vadd.f32 0.0, %v2399
      %2401 = vmatmul.bf16.gmra.mxu0 %v913
      %v2402 = vpop.f32.mrf.mxu0
      %v2403 = vadd.f32 0.0, %v2402
      %v2404 = vpop.f32.mrf.mxu0
      %v2405 = vadd.f32 0.0, %v2404
      %2406 = vmatmul.bf16.gmra.mxu0 %v916
      %v2407 = vpop.f32.mrf.mxu0
      %v2408 = vadd.f32 0.0, %v2407
      %v2409 = vpop.f32.mrf.mxu0
      %v2410 = vadd.f32 0.0, %v2409
      %2411 = vmatmul.bf16.gmra.mxu0 %v919
      %v2412 = vpop.f32.mrf.mxu0
      %v2413 = vadd.f32 0.0, %v2412
      %v2414 = vpop.f32.mrf.mxu0
      %v2415 = vadd.f32 0.0, %v2414
      %2416 = vmatmul.bf16.gmra.mxu0 %v922
      %v2417 = vpop.f32.mrf.mxu0
      %v2418 = vadd.f32 0.0, %v2417
      %v2419 = vpop.f32.mrf.mxu0
      %v2420 = vadd.f32 0.0, %v2419
      %2421 = vmatmul.bf16.gmra.mxu0 %v925
      %v2422 = vpop.f32.mrf.mxu0
      %v2423 = vadd.f32 0.0, %v2422
      %v2424 = vpop.f32.mrf.mxu0
      %v2425 = vadd.f32 0.0, %v2424
      %2426 = vmatmul.bf16.gmra.mxu0 %v2307
      %v2427 = vpop.f32.mrf.mxu0
      %v2428 = vadd.f32 0.0, %v2427
      %v2429 = vpop.f32.mrf.mxu0
      %v2430 = vadd.f32 0.0, %v2429
      %2431 = vmatmul.bf16.gmra.mxu0 %v2310
      %v2432 = vpop.f32.mrf.mxu0
      %v2433 = vadd.f32 0.0, %v2432
      %v2434 = vpop.f32.mrf.mxu0
      %v2435 = vadd.f32 0.0, %v2434
      %2436 = vmatmul.bf16.gmra.mxu0 %v2313
      %v2437 = vpop.f32.mrf.mxu0
      %v2438 = vadd.f32 0.0, %v2437
      %v2439 = vpop.f32.mrf.mxu0
      %v2440 = vadd.f32 0.0, %v2439
      %2441 = vmatmul.bf16.gmra.mxu0 %v2316
      %v2442 = vpop.f32.mrf.mxu0
      %v2443 = vadd.f32 0.0, %v2442
      %v2444 = vpop.f32.mrf.mxu0
      %2445 = vdwg.mxu0
      %v2446 = vadd.f32 %v2223, %v2328
      %v2447 = vadd.f32 %v2224, %v2330
      %v2448 = vadd.f32 %v2225, %v2333
      %v2449 = vadd.f32 %v2226, %v2335
      %v2450 = vadd.f32 %v2227, %v2338
      %v2451 = vadd.f32 %v2228, %v2340
      %v2452 = vadd.f32 %v2229, %v2343
      %v2453 = vadd.f32 %v2230, %v2345
      %v2454 = vadd.f32 %v2231, %v2348
      %v2455 = vadd.f32 %v2232, %v2350
      %v2456 = vadd.f32 %v2233, %v2353
      %v2457 = vadd.f32 %v2234, %v2355
      %v2458 = vadd.f32 %v2235, %v2358
      %v2459 = vadd.f32 %v2236, %v2360
      %v2460 = vadd.f32 %v2237, %v2363
      %v2461 = vadd.f32 %v2238, %v2365
      %v2462 = vadd.f32 %v2239, %v2368
      %v2463 = vadd.f32 %v2240, %v2370
      %v2464 = vadd.f32 %v2241, %v2373
      %v2465 = vadd.f32 %v2242, %v2375
      %v2466 = vadd.f32 %v2243, %v2378
      %v2467 = vadd.f32 %v2244, %v2380
      %v2468 = vadd.f32 %v2245, %v2383
      %v2469 = vadd.f32 %v2246, %v2385
      %v2470 = vadd.f32 %v2247, %v2388
      %v2471 = vadd.f32 %v2248, %v2390
      %v2472 = vadd.f32 %v2249, %v2393
      %v2473 = vadd.f32 %v2250, %v2395
      %v2474 = vadd.f32 %v2251, %v2398
      %v2475 = vadd.f32 %v2252, %v2400
      %v2476 = vadd.f32 %v2253, %v2403
      %v2477 = vadd.f32 %v2254, %v2405
      %v2478 = vadd.f32 %v2255, %v2408
      %v2479 = vadd.f32 %v2256, %v2410
      %v2480 = vadd.f32 %v2257, %v2413
      %v2481 = vadd.f32 %v2258, %v2415
      %v2482 = vadd.f32 %v2259, %v2418
      %v2483 = vadd.f32 %v2260, %v2420
      %v2484 = vadd.f32 %v2261, %v2423
      %v2485 = vadd.f32 %v2262, %v2425
      %v2486 = vadd.f32 %v2263, %v2428
      %v2487 = vadd.f32 %v2264, %v2430
      %v2488 = vadd.f32 %v2265, %v2433
      %v2489 = vadd.f32 %v2266, %v2435
      %v2490 = vadd.f32 %v2267, %v2438
      %v2491 = vadd.f32 %v2268, %v2440
      %v2492 = vadd.f32 %v2269, %v2443
      %v2493 = vpack.c.bf16 %v389, %v390
      %v2494 = vpack.c.bf16 %v387, %v388
      %v2495 = vpack.c.bf16 %v385, %v386
      %v2496 = vpack.c.bf16 %v384, %v384
      %v2497 = vld [vmem:[%s2 + $0xe0] sm:$0xf]
      %v2498 = vld [vmem:[%s2 + $0xe4] sm:$0xf]
      %v2499 = vld [vmem:[%s2 + $0xe8] sm:$0xf]
      %v2500 = vld [vmem:[%s2 + $0xec] sm:$0xf]
      %v2501 = vld [vmem:[%s2 + $0xf0] sm:$0xf]
      %v2502 = vld [vmem:[%s2 + $0xf4] sm:$0xf]
      %v2503 = vld [vmem:[%s2 + $0xf8] sm:$0xf]
      %v2504 = vld [vmem:[%s2 + $0xfc] sm:$0xf]
      %v2513 = vunpack.c.l.b16 %v2497
      %v2514 = vunpack.c.l.b16 %v2498
      %v2515 = vunpack.c.l.b16 %v2499
      %v2516 = vunpack.c.l.b16 %v2500
      %v2517 = vunpack.c.l.b16 %v2501
      %v2518 = vunpack.c.l.b16 %v2502
      %v2519 = vunpack.c.l.b16 %v2503
      %v2520 = vunpack.c.l.b16 %v2504
      %v2521 = vpack.c.b16 %v2514, %v2513
      %v2522 = vpack.c.b16 %v2516, %v2515
      %v2523 = vpack.c.b16 %v2518, %v2517
      %v2524 = vpack.c.b16 %v2520, %v2519
      %v2530 = vsel %vm633, %v2493, 0
      %v2533 = vsel %vm633, %v2494, 0
      %v2536 = vsel %vm633, %v2495, 0
      %v2539 = vsel %vm633, %v2496, 0
      %2541 = vmatpush.bf16.msra.mxu0 0
      %2542 = vmatpush.bf16.msra.mxu0 0
      %2543 = vmatpush.bf16.msra.mxu0 0
      %2544 = vmatpush.bf16.msra.mxu0 0
      %2545 = vmatpush.bf16.msra.mxu0 %v2524
      %2546 = vmatpush.bf16.msra.mxu0 %v2523
      %2547 = vmatpush.bf16.msra.mxu0 %v2522
      %2548 = vmatpush.bf16.msra.mxu0 %v2521
      %2549 = vmatmul.bf16.gmra.mxu0 %v644
      %v2550 = vpop.f32.mrf.mxu0
      %v2551 = vadd.f32 0.0, %v2550
      %v2552 = vpop.f32.mrf.mxu0
      %v2553 = vadd.f32 0.0, %v2552
      %2554 = vmatmul.bf16.gmra.mxu0 %v647
      %v2555 = vpop.f32.mrf.mxu0
      %v2556 = vadd.f32 0.0, %v2555
      %v2557 = vpop.f32.mrf.mxu0
      %v2558 = vadd.f32 0.0, %v2557
      %2559 = vmatmul.bf16.gmra.mxu0 %v650
      %v2560 = vpop.f32.mrf.mxu0
      %v2561 = vadd.f32 0.0, %v2560
      %v2562 = vpop.f32.mrf.mxu0
      %v2563 = vadd.f32 0.0, %v2562
      %2564 = vmatmul.bf16.gmra.mxu0 %v653
      %v2565 = vpop.f32.mrf.mxu0
      %v2566 = vadd.f32 0.0, %v2565
      %v2567 = vpop.f32.mrf.mxu0
      %v2568 = vadd.f32 0.0, %v2567
      %2569 = vmatmul.bf16.gmra.mxu0 %v656
      %v2570 = vpop.f32.mrf.mxu0
      %v2571 = vadd.f32 0.0, %v2570
      %v2572 = vpop.f32.mrf.mxu0
      %v2573 = vadd.f32 0.0, %v2572
      %2574 = vmatmul.bf16.gmra.mxu0 %v659
      %v2575 = vpop.f32.mrf.mxu0
      %v2576 = vadd.f32 0.0, %v2575
      %v2577 = vpop.f32.mrf.mxu0
      %v2578 = vadd.f32 0.0, %v2577
      %2579 = vmatmul.bf16.gmra.mxu0 %v662
      %v2580 = vpop.f32.mrf.mxu0
      %v2581 = vadd.f32 0.0, %v2580
      %v2582 = vpop.f32.mrf.mxu0
      %v2583 = vadd.f32 0.0, %v2582
      %2584 = vmatmul.bf16.gmra.mxu0 %v665
      %v2585 = vpop.f32.mrf.mxu0
      %v2586 = vadd.f32 0.0, %v2585
      %v2587 = vpop.f32.mrf.mxu0
      %v2588 = vadd.f32 0.0, %v2587
      %2589 = vmatmul.bf16.gmra.mxu0 %v668
      %v2590 = vpop.f32.mrf.mxu0
      %v2591 = vadd.f32 0.0, %v2590
      %v2592 = vpop.f32.mrf.mxu0
      %v2593 = vadd.f32 0.0, %v2592
      %2594 = vmatmul.bf16.gmra.mxu0 %v671
      %v2595 = vpop.f32.mrf.mxu0
      %v2596 = vadd.f32 0.0, %v2595
      %v2597 = vpop.f32.mrf.mxu0
      %v2598 = vadd.f32 0.0, %v2597
      %2599 = vmatmul.bf16.gmra.mxu0 %v674
      %v2600 = vpop.f32.mrf.mxu0
      %v2601 = vadd.f32 0.0, %v2600
      %v2602 = vpop.f32.mrf.mxu0
      %v2603 = vadd.f32 0.0, %v2602
      %2604 = vmatmul.bf16.gmra.mxu0 %v677
      %v2605 = vpop.f32.mrf.mxu0
      %v2606 = vadd.f32 0.0, %v2605
      %v2607 = vpop.f32.mrf.mxu0
      %v2608 = vadd.f32 0.0, %v2607
      %2609 = vmatmul.bf16.gmra.mxu0 %v680
      %v2610 = vpop.f32.mrf.mxu0
      %v2611 = vadd.f32 0.0, %v2610
      %v2612 = vpop.f32.mrf.mxu0
      %v2613 = vadd.f32 0.0, %v2612
      %2614 = vmatmul.bf16.gmra.mxu0 %v683
      %v2615 = vpop.f32.mrf.mxu0
      %v2616 = vadd.f32 0.0, %v2615
      %v2617 = vpop.f32.mrf.mxu0
      %v2618 = vadd.f32 0.0, %v2617
      %2619 = vmatmul.bf16.gmra.mxu0 %v686
      %v2620 = vpop.f32.mrf.mxu0
      %v2621 = vadd.f32 0.0, %v2620
      %v2622 = vpop.f32.mrf.mxu0
      %v2623 = vadd.f32 0.0, %v2622
      %2624 = vmatmul.bf16.gmra.mxu0 %v689
      %v2625 = vpop.f32.mrf.mxu0
      %v2626 = vadd.f32 0.0, %v2625
      %v2627 = vpop.f32.mrf.mxu0
      %v2628 = vadd.f32 0.0, %v2627
      %2629 = vmatmul.bf16.gmra.mxu0 %v692
      %v2630 = vpop.f32.mrf.mxu0
      %v2631 = vadd.f32 0.0, %v2630
      %v2632 = vpop.f32.mrf.mxu0
      %v2633 = vadd.f32 0.0, %v2632
      %2634 = vmatmul.bf16.gmra.mxu0 %v695
      %v2635 = vpop.f32.mrf.mxu0
      %v2636 = vadd.f32 0.0, %v2635
      %v2637 = vpop.f32.mrf.mxu0
      %v2638 = vadd.f32 0.0, %v2637
      %2639 = vmatmul.bf16.gmra.mxu0 %v698
      %v2640 = vpop.f32.mrf.mxu0
      %v2641 = vadd.f32 0.0, %v2640
      %v2642 = vpop.f32.mrf.mxu0
      %v2643 = vadd.f32 0.0, %v2642
      %2644 = vmatmul.bf16.gmra.mxu0 %v701
      %v2645 = vpop.f32.mrf.mxu0
      %v2646 = vadd.f32 0.0, %v2645
      %v2647 = vpop.f32.mrf.mxu0
      %v2648 = vadd.f32 0.0, %v2647
      %2649 = vmatmul.bf16.gmra.mxu0 %v2530
      %v2650 = vpop.f32.mrf.mxu0
      %v2651 = vadd.f32 0.0, %v2650
      %v2652 = vpop.f32.mrf.mxu0
      %v2653 = vadd.f32 0.0, %v2652
      %2654 = vmatmul.bf16.gmra.mxu0 %v2533
      %v2655 = vpop.f32.mrf.mxu0
      %v2656 = vadd.f32 0.0, %v2655
      %v2657 = vpop.f32.mrf.mxu0
      %v2658 = vadd.f32 0.0, %v2657
      %2659 = vmatmul.bf16.gmra.mxu0 %v2536
      %v2660 = vpop.f32.mrf.mxu0
      %v2661 = vadd.f32 0.0, %v2660
      %v2662 = vpop.f32.mrf.mxu0
      %v2663 = vadd.f32 0.0, %v2662
      %2664 = vmatmul.bf16.gmra.mxu0 %v2539
      %v2665 = vpop.f32.mrf.mxu0
      %v2666 = vadd.f32 0.0, %v2665
      %v2667 = vpop.f32.mrf.mxu0
      %2668 = vdwg.mxu0
      %v2669 = vadd.f32 %v2446, %v2551
      %v2670 = vadd.f32 %v2447, %v2553
      %v2671 = vadd.f32 %v2448, %v2556
      %v2672 = vadd.f32 %v2449, %v2558
      %v2673 = vadd.f32 %v2450, %v2561
      %v2674 = vadd.f32 %v2451, %v2563
      %v2675 = vadd.f32 %v2452, %v2566
      %v2676 = vadd.f32 %v2453, %v2568
      %v2677 = vadd.f32 %v2454, %v2571
      %v2678 = vadd.f32 %v2455, %v2573
      %v2679 = vadd.f32 %v2456, %v2576
      %v2680 = vadd.f32 %v2457, %v2578
      %v2681 = vadd.f32 %v2458, %v2581
      %v2682 = vadd.f32 %v2459, %v2583
      %v2683 = vadd.f32 %v2460, %v2586
      %v2684 = vadd.f32 %v2461, %v2588
      %v2685 = vadd.f32 %v2462, %v2591
      %v2686 = vadd.f32 %v2463, %v2593
      %v2687 = vadd.f32 %v2464, %v2596
      %v2688 = vadd.f32 %v2465, %v2598
      %v2689 = vadd.f32 %v2466, %v2601
      %v2690 = vadd.f32 %v2467, %v2603
      %v2691 = vadd.f32 %v2468, %v2606
      %v2692 = vadd.f32 %v2469, %v2608
      %v2693 = vadd.f32 %v2470, %v2611
      %v2694 = vadd.f32 %v2471, %v2613
      %v2695 = vadd.f32 %v2472, %v2616
      %v2696 = vadd.f32 %v2473, %v2618
      %v2697 = vadd.f32 %v2474, %v2621
      %v2698 = vadd.f32 %v2475, %v2623
      %v2699 = vadd.f32 %v2476, %v2626
      %v2700 = vadd.f32 %v2477, %v2628
      %v2701 = vadd.f32 %v2478, %v2631
      %v2702 = vadd.f32 %v2479, %v2633
      %v2703 = vadd.f32 %v2480, %v2636
      %v2704 = vadd.f32 %v2481, %v2638
      %v2705 = vadd.f32 %v2482, %v2641
      %v2706 = vadd.f32 %v2483, %v2643
      %v2707 = vadd.f32 %v2484, %v2646
      %v2708 = vadd.f32 %v2485, %v2648
      %v2709 = vadd.f32 %v2486, %v2651
      %v2710 = vadd.f32 %v2487, %v2653
      %v2711 = vadd.f32 %v2488, %v2656
      %v2712 = vadd.f32 %v2489, %v2658
      %v2713 = vadd.f32 %v2490, %v2661
      %v2714 = vadd.f32 %v2491, %v2663
      %v2715 = vadd.f32 %v2492, %v2666
      %v2716 = vpack.c.bf16 %v497, %v498
      %v2717 = vpack.c.bf16 %v495, %v496
      %v2718 = vpack.c.bf16 %v493, %v494
      %v2719 = vpack.c.bf16 %v492, %v492
      %v2720 = vld [vmem:[%s2 + $0x100] sm:$0xf]
      %v2721 = vld [vmem:[%s2 + $0x104] sm:$0xf]
      %v2722 = vld [vmem:[%s2 + $0x108] sm:$0xf]
      %v2723 = vld [vmem:[%s2 + $0x10c] sm:$0xf]
      %v2724 = vld [vmem:[%s2 + $0x110] sm:$0xf]
      %v2725 = vld [vmem:[%s2 + $0x114] sm:$0xf]
      %v2726 = vld [vmem:[%s2 + $0x118] sm:$0xf]
      %v2727 = vld [vmem:[%s2 + $0x11c] sm:$0xf]
      %v2736 = vunpack.c.l.b16 %v2720
      %v2737 = vunpack.c.l.b16 %v2721
      %v2738 = vunpack.c.l.b16 %v2722
      %v2739 = vunpack.c.l.b16 %v2723
      %v2740 = vunpack.c.l.b16 %v2724
      %v2741 = vunpack.c.l.b16 %v2725
      %v2742 = vunpack.c.l.b16 %v2726
      %v2743 = vunpack.c.l.b16 %v2727
      %v2744 = vpack.c.b16 %v2737, %v2736
      %v2745 = vpack.c.b16 %v2739, %v2738
      %v2746 = vpack.c.b16 %v2741, %v2740
      %v2747 = vpack.c.b16 %v2743, %v2742
      %v2753 = vsel %vm633, %v2716, 0
      %v2756 = vsel %vm633, %v2717, 0
      %v2759 = vsel %vm633, %v2718, 0
      %v2762 = vsel %vm633, %v2719, 0
      %2764 = vmatpush.bf16.msra.mxu0 0
      %2765 = vmatpush.bf16.msra.mxu0 0
      %2766 = vmatpush.bf16.msra.mxu0 0
      %2767 = vmatpush.bf16.msra.mxu0 0
      %2768 = vmatpush.bf16.msra.mxu0 %v2747
      %2769 = vmatpush.bf16.msra.mxu0 %v2746
      %2770 = vmatpush.bf16.msra.mxu0 %v2745
      %2771 = vmatpush.bf16.msra.mxu0 %v2744
      %2772 = vmatmul.bf16.gmra.mxu0 %v1124
      %v2773 = vpop.f32.mrf.mxu0
      %v2774 = vadd.f32 0.0, %v2773
      %v2775 = vpop.f32.mrf.mxu0
      %v2776 = vadd.f32 0.0, %v2775
      %2777 = vmatmul.bf16.gmra.mxu0 %v1127
      %v2778 = vpop.f32.mrf.mxu0
      %v2779 = vadd.f32 0.0, %v2778
      %v2780 = vpop.f32.mrf.mxu0
      %v2781 = vadd.f32 0.0, %v2780
      %2782 = vmatmul.bf16.gmra.mxu0 %v1130
      %v2783 = vpop.f32.mrf.mxu0
      %v2784 = vadd.f32 0.0, %v2783
      %v2785 = vpop.f32.mrf.mxu0
      %v2786 = vadd.f32 0.0, %v2785
      %2787 = vmatmul.bf16.gmra.mxu0 %v1133
      %v2788 = vpop.f32.mrf.mxu0
      %v2789 = vadd.f32 0.0, %v2788
      %v2790 = vpop.f32.mrf.mxu0
      %v2791 = vadd.f32 0.0, %v2790
      %2792 = vmatmul.bf16.gmra.mxu0 %v1136
      %v2793 = vpop.f32.mrf.mxu0
      %v2794 = vadd.f32 0.0, %v2793
      %v2795 = vpop.f32.mrf.mxu0
      %v2796 = vadd.f32 0.0, %v2795
      %2797 = vmatmul.bf16.gmra.mxu0 %v1139
      %v2798 = vpop.f32.mrf.mxu0
      %v2799 = vadd.f32 0.0, %v2798
      %v2800 = vpop.f32.mrf.mxu0
      %v2801 = vadd.f32 0.0, %v2800
      %2802 = vmatmul.bf16.gmra.mxu0 %v1142
      %v2803 = vpop.f32.mrf.mxu0
      %v2804 = vadd.f32 0.0, %v2803
      %v2805 = vpop.f32.mrf.mxu0
      %v2806 = vadd.f32 0.0, %v2805
      %2807 = vmatmul.bf16.gmra.mxu0 %v1145
      %v2808 = vpop.f32.mrf.mxu0
      %v2809 = vadd.f32 0.0, %v2808
      %v2810 = vpop.f32.mrf.mxu0
      %v2811 = vadd.f32 0.0, %v2810
      %2812 = vmatmul.bf16.gmra.mxu0 %v1148
      %v2813 = vpop.f32.mrf.mxu0
      %v2814 = vadd.f32 0.0, %v2813
      %v2815 = vpop.f32.mrf.mxu0
      %v2816 = vadd.f32 0.0, %v2815
      %2817 = vmatmul.bf16.gmra.mxu0 %v1151
      %v2818 = vpop.f32.mrf.mxu0
      %v2819 = vadd.f32 0.0, %v2818
      %v2820 = vpop.f32.mrf.mxu0
      %v2821 = vadd.f32 0.0, %v2820
      %2822 = vmatmul.bf16.gmra.mxu0 %v1154
      %v2823 = vpop.f32.mrf.mxu0
      %v2824 = vadd.f32 0.0, %v2823
      %v2825 = vpop.f32.mrf.mxu0
      %v2826 = vadd.f32 0.0, %v2825
      %2827 = vmatmul.bf16.gmra.mxu0 %v1157
      %v2828 = vpop.f32.mrf.mxu0
      %v2829 = vadd.f32 0.0, %v2828
      %v2830 = vpop.f32.mrf.mxu0
      %v2831 = vadd.f32 0.0, %v2830
      %2832 = vmatmul.bf16.gmra.mxu0 %v1160
      %v2833 = vpop.f32.mrf.mxu0
      %v2834 = vadd.f32 0.0, %v2833
      %v2835 = vpop.f32.mrf.mxu0
      %v2836 = vadd.f32 0.0, %v2835
      %2837 = vmatmul.bf16.gmra.mxu0 %v1163
      %v2838 = vpop.f32.mrf.mxu0
      %v2839 = vadd.f32 0.0, %v2838
      %v2840 = vpop.f32.mrf.mxu0
      %v2841 = vadd.f32 0.0, %v2840
      %2842 = vmatmul.bf16.gmra.mxu0 %v1166
      %v2843 = vpop.f32.mrf.mxu0
      %v2844 = vadd.f32 0.0, %v2843
      %v2845 = vpop.f32.mrf.mxu0
      %v2846 = vadd.f32 0.0, %v2845
      %2847 = vmatmul.bf16.gmra.mxu0 %v1169
      %v2848 = vpop.f32.mrf.mxu0
      %v2849 = vadd.f32 0.0, %v2848
      %v2850 = vpop.f32.mrf.mxu0
      %v2851 = vadd.f32 0.0, %v2850
      %2852 = vmatmul.bf16.gmra.mxu0 %v1172
      %v2853 = vpop.f32.mrf.mxu0
      %v2854 = vadd.f32 0.0, %v2853
      %v2855 = vpop.f32.mrf.mxu0
      %v2856 = vadd.f32 0.0, %v2855
      %2857 = vmatmul.bf16.gmra.mxu0 %v1175
      %v2858 = vpop.f32.mrf.mxu0
      %v2859 = vadd.f32 0.0, %v2858
      %v2860 = vpop.f32.mrf.mxu0
      %v2861 = vadd.f32 0.0, %v2860
      %2862 = vmatmul.bf16.gmra.mxu0 %v1178
      %v2863 = vpop.f32.mrf.mxu0
      %v2864 = vadd.f32 0.0, %v2863
      %v2865 = vpop.f32.mrf.mxu0
      %v2866 = vadd.f32 0.0, %v2865
      %2867 = vmatmul.bf16.gmra.mxu0 %v1181
      %v2868 = vpop.f32.mrf.mxu0
      %v2869 = vadd.f32 0.0, %v2868
      %v2870 = vpop.f32.mrf.mxu0
      %v2871 = vadd.f32 0.0, %v2870
      %2872 = vmatmul.bf16.gmra.mxu0 %v2753
      %v2873 = vpop.f32.mrf.mxu0
      %v2874 = vadd.f32 0.0, %v2873
      %v2875 = vpop.f32.mrf.mxu0
      %v2876 = vadd.f32 0.0, %v2875
      %2877 = vmatmul.bf16.gmra.mxu0 %v2756
      %v2878 = vpop.f32.mrf.mxu0
      %v2879 = vadd.f32 0.0, %v2878
      %v2880 = vpop.f32.mrf.mxu0
      %v2881 = vadd.f32 0.0, %v2880
      %2882 = vmatmul.bf16.gmra.mxu0 %v2759
      %v2883 = vpop.f32.mrf.mxu0
      %v2884 = vadd.f32 0.0, %v2883
      %v2885 = vpop.f32.mrf.mxu0
      %v2886 = vadd.f32 0.0, %v2885
      %2887 = vmatmul.bf16.gmra.mxu0 %v2762
      %v2888 = vpop.f32.mrf.mxu0
      %v2889 = vadd.f32 0.0, %v2888
      %v2890 = vpop.f32.mrf.mxu0
      %2891 = vdwg.mxu0
      %v2892 = vadd.f32 %v2669, %v2774
      %v2893 = vadd.f32 %v2670, %v2776
      %v2894 = vadd.f32 %v2671, %v2779
      %v2895 = vadd.f32 %v2672, %v2781
      %v2896 = vadd.f32 %v2673, %v2784
      %v2897 = vadd.f32 %v2674, %v2786
      %v2898 = vadd.f32 %v2675, %v2789
      %v2899 = vadd.f32 %v2676, %v2791
      %v2900 = vadd.f32 %v2677, %v2794
      %v2901 = vadd.f32 %v2678, %v2796
      %v2902 = vadd.f32 %v2679, %v2799
      %v2903 = vadd.f32 %v2680, %v2801
      %v2904 = vadd.f32 %v2681, %v2804
      %v2905 = vadd.f32 %v2682, %v2806
      %v2906 = vadd.f32 %v2683, %v2809
      %v2907 = vadd.f32 %v2684, %v2811
      %v2908 = vadd.f32 %v2685, %v2814
      %v2909 = vadd.f32 %v2686, %v2816
      %v2910 = vadd.f32 %v2687, %v2819
      %v2911 = vadd.f32 %v2688, %v2821
      %v2912 = vadd.f32 %v2689, %v2824
      %v2913 = vadd.f32 %v2690, %v2826
      %v2914 = vadd.f32 %v2691, %v2829
      %v2915 = vadd.f32 %v2692, %v2831
      %v2916 = vadd.f32 %v2693, %v2834
      %v2917 = vadd.f32 %v2694, %v2836
      %v2918 = vadd.f32 %v2695, %v2839
      %v2919 = vadd.f32 %v2696, %v2841
      %v2920 = vadd.f32 %v2697, %v2844
      %v2921 = vadd.f32 %v2698, %v2846
      %v2922 = vadd.f32 %v2699, %v2849
      %v2923 = vadd.f32 %v2700, %v2851
      %v2924 = vadd.f32 %v2701, %v2854
      %v2925 = vadd.f32 %v2702, %v2856
      %v2926 = vadd.f32 %v2703, %v2859
      %v2927 = vadd.f32 %v2704, %v2861
      %v2928 = vadd.f32 %v2705, %v2864
      %v2929 = vadd.f32 %v2706, %v2866
      %v2930 = vadd.f32 %v2707, %v2869
      %v2931 = vadd.f32 %v2708, %v2871
      %v2932 = vadd.f32 %v2709, %v2874
      %v2933 = vadd.f32 %v2710, %v2876
      %v2934 = vadd.f32 %v2711, %v2879
      %v2935 = vadd.f32 %v2712, %v2881
      %v2936 = vadd.f32 %v2713, %v2884
      %v2937 = vadd.f32 %v2714, %v2886
      %v2938 = vadd.f32 %v2715, %v2889
      %v2939 = vld [vmem:[%s3] sm:$0x1]
      %v2941 = vperm.slane %v2939, 0
      %v2943 = vadd.f32 %v2892, %v2941
      %v2944 = vadd.f32 %v2893, %v2941
      %v2945 = vadd.f32 %v2894, %v2941
      %v2946 = vadd.f32 %v2895, %v2941
      %v2947 = vadd.f32 %v2896, %v2941
      %v2948 = vadd.f32 %v2897, %v2941
      %v2949 = vadd.f32 %v2898, %v2941
      %v2950 = vadd.f32 %v2899, %v2941
      %v2951 = vadd.f32 %v2900, %v2941
      %v2952 = vadd.f32 %v2901, %v2941
      %v2953 = vadd.f32 %v2902, %v2941
      %v2954 = vadd.f32 %v2903, %v2941
      %v2955 = vadd.f32 %v2904, %v2941
      %v2956 = vadd.f32 %v2905, %v2941
      %v2957 = vadd.f32 %v2906, %v2941
      %v2958 = vadd.f32 %v2907, %v2941
      %v2959 = vadd.f32 %v2908, %v2941
      %v2960 = vadd.f32 %v2909, %v2941
      %v2961 = vadd.f32 %v2910, %v2941
      %v2962 = vadd.f32 %v2911, %v2941
      %v2963 = vadd.f32 %v2912, %v2941
      %v2964 = vadd.f32 %v2913, %v2941
      %v2965 = vadd.f32 %v2914, %v2941
      %v2966 = vadd.f32 %v2915, %v2941
      %v2967 = vadd.f32 %v2916, %v2941
      %v2968 = vadd.f32 %v2917, %v2941
      %v2969 = vadd.f32 %v2918, %v2941
      %v2970 = vadd.f32 %v2919, %v2941
      %v2971 = vadd.f32 %v2920, %v2941
      %v2972 = vadd.f32 %v2921, %v2941
      %v2973 = vadd.f32 %v2922, %v2941
      %v2974 = vadd.f32 %v2923, %v2941
      %v2975 = vadd.f32 %v2924, %v2941
      %v2976 = vadd.f32 %v2925, %v2941
      %v2977 = vadd.f32 %v2926, %v2941
      %v2978 = vadd.f32 %v2927, %v2941
      %v2979 = vadd.f32 %v2928, %v2941
      %v2980 = vadd.f32 %v2929, %v2941
      %v2981 = vadd.f32 %v2930, %v2941
      %v2982 = vadd.f32 %v2931, %v2941
      %v2983 = vadd.f32 %v2932, %v2941
      %v2984 = vadd.f32 %v2933, %v2941
      %v2985 = vadd.f32 %v2934, %v2941
      %v2986 = vadd.f32 %v2935, %v2941
      %v2987 = vadd.f32 %v2936, %v2941
      %v2988 = vadd.f32 %v2937, %v2941
      %v2989 = vadd.f32 %v2938, %v2941
      %v2990 = vmax.f32 %v2943, 0.0
      %v2991 = vmax.f32 %v2944, 0.0
      %v2992 = vmax.f32 %v2945, 0.0
      %v2993 = vmax.f32 %v2946, 0.0
      %v2994 = vmax.f32 %v2947, 0.0
      %v2995 = vmax.f32 %v2948, 0.0
      %v2996 = vmax.f32 %v2949, 0.0
      %v2997 = vmax.f32 %v2950, 0.0
      %v2998 = vmax.f32 %v2951, 0.0
      %v2999 = vmax.f32 %v2952, 0.0
      %v3000 = vmax.f32 %v2953, 0.0
      %v3001 = vmax.f32 %v2954, 0.0
      %v3002 = vmax.f32 %v2955, 0.0
      %v3003 = vmax.f32 %v2956, 0.0
      %v3004 = vmax.f32 %v2957, 0.0
      %v3005 = vmax.f32 %v2958, 0.0
      %v3006 = vmax.f32 %v2959, 0.0
      %v3007 = vmax.f32 %v2960, 0.0
      %v3008 = vmax.f32 %v2961, 0.0
      %v3009 = vmax.f32 %v2962, 0.0
      %v3010 = vmax.f32 %v2963, 0.0
      %v3011 = vmax.f32 %v2964, 0.0
      %v3012 = vmax.f32 %v2965, 0.0
      %v3013 = vmax.f32 %v2966, 0.0
      %v3014 = vmax.f32 %v2967, 0.0
      %v3015 = vmax.f32 %v2968, 0.0
      %v3016 = vmax.f32 %v2969, 0.0
      %v3017 = vmax.f32 %v2970, 0.0
      %v3018 = vmax.f32 %v2971, 0.0
      %v3019 = vmax.f32 %v2972, 0.0
      %v3020 = vmax.f32 %v2973, 0.0
      %v3021 = vmax.f32 %v2974, 0.0
      %v3022 = vmax.f32 %v2975, 0.0
      %v3023 = vmax.f32 %v2976, 0.0
      %v3024 = vmax.f32 %v2977, 0.0
      %v3025 = vmax.f32 %v2978, 0.0
      %v3026 = vmax.f32 %v2979, 0.0
      %v3027 = vmax.f32 %v2980, 0.0
      %v3028 = vmax.f32 %v2981, 0.0
      %v3029 = vmax.f32 %v2982, 0.0
      %v3030 = vmax.f32 %v2983, 0.0
      %v3031 = vmax.f32 %v2984, 0.0
      %v3032 = vmax.f32 %v2985, 0.0
      %v3033 = vmax.f32 %v2986, 0.0
      %v3034 = vmax.f32 %v2987, 0.0
      %v3035 = vmax.f32 %v2988, 0.0
      %v3036 = vmax.f32 %v2989, 0.0
      %v3037 = vmul.f32 %v433, %v2990
      %v3038 = vmul.f32 %v432, %v2991
      %v3039 = vmul.f32 %v431, %v2992
      %v3040 = vmul.f32 %v430, %v2993
      %v3041 = vmul.f32 %v429, %v2994
      %v3042 = vmul.f32 %v428, %v2995
      %v3043 = vmul.f32 %v427, %v2996
      %v3044 = vmul.f32 %v426, %v2997
      %v3045 = vmul.f32 %v425, %v2998
      %v3046 = vmul.f32 %v424, %v2999
      %v3047 = vmul.f32 %v423, %v3000
      %v3048 = vmul.f32 %v422, %v3001
      %v3049 = vmul.f32 %v421, %v3002
      %v3050 = vmul.f32 %v420, %v3003
      %v3051 = vmul.f32 %v419, %v3004
      %v3052 = vmul.f32 %v418, %v3005
      %v3053 = vmul.f32 %v417, %v3006
      %v3054 = vmul.f32 %v416, %v3007
      %v3055 = vmul.f32 %v415, %v3008
      %v3056 = vmul.f32 %v414, %v3009
      %v3057 = vmul.f32 %v413, %v3010
      %v3058 = vmul.f32 %v412, %v3011
      %v3059 = vmul.f32 %v411, %v3012
      %v3060 = vmul.f32 %v410, %v3013
      %v3061 = vmul.f32 %v409, %v3014
      %v3062 = vmul.f32 %v408, %v3015
      %v3063 = vmul.f32 %v407, %v3016
      %v3064 = vmul.f32 %v406, %v3017
      %v3065 = vmul.f32 %v405, %v3018
      %v3066 = vmul.f32 %v404, %v3019
      %v3067 = vmul.f32 %v403, %v3020
      %v3068 = vmul.f32 %v402, %v3021
      %v3069 = vmul.f32 %v401, %v3022
      %v3070 = vmul.f32 %v400, %v3023
      %v3071 = vmul.f32 %v399, %v3024
      %v3072 = vmul.f32 %v398, %v3025
      %v3073 = vmul.f32 %v397, %v3026
      %v3074 = vmul.f32 %v396, %v3027
      %v3075 = vmul.f32 %v395, %v3028
      %v3076 = vmul.f32 %v394, %v3029
      %v3077 = vmul.f32 %v393, %v3030
      %v3078 = vmul.f32 %v392, %v3031
      %v3079 = vmul.f32 %v391, %v3032
      %v3080 = vmul.f32 %v390, %v3033
      %v3081 = vmul.f32 %v389, %v3034
      %v3082 = vmul.f32 %v388, %v3035
      %v3083 = vmul.f32 %v387, %v3036
      %vm3084 = vcmask 982016
      %v3086 = vsel %vm3084, 1.0, 0
      %3088 = vmatpush.msra.mxu0 %v3052
      %3089 = vmatpush.msra.mxu0 %v3051
      %3090 = vmatpush.msra.mxu0 %v3050
      %3091 = vmatpush.msra.mxu0 %v3049
      %3092 = vmatpush.msra.mxu0 %v3048
      %3093 = vmatpush.msra.mxu0 %v3047
      %3094 = vmatpush.msra.mxu0 %v3046
      %3095 = vmatpush.msra.mxu0 %v3045
      %3096 = vmatpush.msra.mxu0 %v3044
      %3097 = vmatpush.msra.mxu0 %v3043
      %3098 = vmatpush.msra.mxu0 %v3042
      %3099 = vmatpush.msra.mxu0 %v3041
      %3100 = vmatpush.msra.mxu0 %v3040
      %3101 = vmatpush.msra.mxu0 %v3039
      %3102 = vmatpush.msra.mxu0 %v3038
      %3103 = vmatpush.msra.mxu0 %v3037
      %3104 = vmatmul.f32.gmra.mxu0 1.0
      %v3105 = vpop.f32.mrf.mxu0
      %v3106 = vadd.f32 0.0, %v3105
      %3107 = vdwg.mxu0
      %3108 = vmatpush.msra.mxu0 %v3068
      %3109 = vmatpush.msra.mxu0 %v3067
      %3110 = vmatpush.msra.mxu0 %v3066
      %3111 = vmatpush.msra.mxu0 %v3065
      %3112 = vmatpush.msra.mxu0 %v3064
      %3113 = vmatpush.msra.mxu0 %v3063
      %3114 = vmatpush.msra.mxu0 %v3062
      %3115 = vmatpush.msra.mxu0 %v3061
      %3116 = vmatpush.msra.mxu0 %v3060
      %3117 = vmatpush.msra.mxu0 %v3059
      %3118 = vmatpush.msra.mxu0 %v3058
      %3119 = vmatpush.msra.mxu0 %v3057
      %3120 = vmatpush.msra.mxu0 %v3056
      %3121 = vmatpush.msra.mxu0 %v3055
      %3122 = vmatpush.msra.mxu0 %v3054
      %3123 = vmatpush.msra.mxu0 %v3053
      %3124 = vmatmul.f32.gmra.mxu0 1.0
      %v3125 = vpop.f32.mrf.mxu0
      %v3126 = vadd.f32 %v3106, %v3125
      %3127 = vdwg.mxu0
      %3128 = vmatpush.msra.mxu0 0.0
      %3129 = vmatpush.msra.mxu0 %v3083
      %3130 = vmatpush.msra.mxu0 %v3082
      %3131 = vmatpush.msra.mxu0 %v3081
      %3132 = vmatpush.msra.mxu0 %v3080
      %3133 = vmatpush.msra.mxu0 %v3079
      %3134 = vmatpush.msra.mxu0 %v3078
      %3135 = vmatpush.msra.mxu0 %v3077
      %3136 = vmatpush.msra.mxu0 %v3076
      %3137 = vmatpush.msra.mxu0 %v3075
      %3138 = vmatpush.msra.mxu0 %v3074
      %3139 = vmatpush.msra.mxu0 %v3073
      %3140 = vmatpush.msra.mxu0 %v3072
      %3141 = vmatpush.msra.mxu0 %v3071
      %3142 = vmatpush.msra.mxu0 %v3070
      %3143 = vmatpush.msra.mxu0 %v3069
      %3144 = vmatmul.f32.gmra.mxu0 %v3086
      %v3145 = vpop.f32.mrf.mxu0
      %v3146 = vadd.f32 %v3126, %v3145
      %3147 = vdwg.mxu0
      %v3148 = vpack.c.bf16 %v3146, %v3146
      %v3149 = vld [vmem:[%s4] sm:$0xf]
      %v3150 = vld [vmem:[%s4 + $0x4] sm:$0xf]
      %v3151 = vld [vmem:[%s4 + $0x8] sm:$0xf]
      %v3152 = vld [vmem:[%s4 + $0xc] sm:$0xf]
      %v3153 = vld [vmem:[%s4 + $0x10] sm:$0xf]
      %v3154 = vld [vmem:[%s4 + $0x14] sm:$0xf]
      %v3155 = vld [vmem:[%s4 + $0x18] sm:$0xf]
      %v3156 = vld [vmem:[%s4 + $0x1c] sm:$0xf]
      %v3165 = vunpack.c.l.b16 %v3149
      %v3166 = vunpack.c.l.b16 %v3150
      %v3167 = vunpack.c.l.b16 %v3151
      %v3168 = vunpack.c.l.b16 %v3152
      %v3169 = vunpack.c.l.b16 %v3153
      %v3170 = vunpack.c.l.b16 %v3154
      %v3171 = vunpack.c.l.b16 %v3155
      %v3172 = vunpack.c.l.b16 %v3156
      %v3173 = vpack.c.b16 %v3166, %v3165
      %v3174 = vpack.c.b16 %v3168, %v3167
      %v3175 = vpack.c.b16 %v3170, %v3169
      %v3176 = vpack.c.b16 %v3172, %v3171
      %v3182 = vsel %vm633, %v3148, 0
      %3184 = vmatpush.bf16.msra.mxu0 0
      %3185 = vmatpush.bf16.msra.mxu0 0
      %3186 = vmatpush.bf16.msra.mxu0 0
      %3187 = vmatpush.bf16.msra.mxu0 0
      %3188 = vmatpush.bf16.msra.mxu0 %v3176
      %3189 = vmatpush.bf16.msra.mxu0 %v3175
      %3190 = vmatpush.bf16.msra.mxu0 %v3174
      %3191 = vmatpush.bf16.msra.mxu0 %v3173
      %3192 = vmatmul.bf16.gmra.mxu0 %v3182
      %v3193 = vpop.f32.mrf.mxu0
      %v3194 = vadd.f32 0.0, %v3193
      %v3195 = vpop.f32.mrf.mxu0
      %3196 = vdwg.mxu0
      %v3197 = vmax.f32 %v3194, 0.0
      %v3198 = vpack.c.bf16 %v3197, %v3197
      %v3199 = vld [vmem:[%s5] sm:$0xf]
      %v3200 = vld [vmem:[%s5 + $0x4] sm:$0xf]
      %v3203 = vunpack.c.l.b16 %v3199
      %v3204 = vunpack.c.l.b16 %v3200
      %v3205 = vpack.c.b16 %v3204, %v3203
      %vm3207 = vcmask 130048
      %v3209 = vsel %vm3207, %v3198, 0
      %3211 = vmatpush.bf16.msra.mxu0 0
      %3212 = vmatpush.bf16.msra.mxu0 0
      %3213 = vmatpush.bf16.msra.mxu0 0
      %3214 = vmatpush.bf16.msra.mxu0 0
      %3215 = vmatpush.bf16.msra.mxu0 0
      %3216 = vmatpush.bf16.msra.mxu0 0
      %3217 = vmatpush.bf16.msra.mxu0 0
      %3218 = vmatpush.bf16.msra.mxu0 %v3205
      %3219 = vmatmul.bf16.gmra.mxu0 %v3209
      %v3220 = vpop.f32.mrf.mxu0
      %v3221 = vadd.f32 0.0, %v3220
      %v3222 = vpop.f32.mrf.mxu0
      %3223 = vdwg.mxu0
      %v3224 = vxor.u32 %v3221, 2147483648
      %v3225 = vmul.f32 %v3224, 1.442695
      %v3226 = vpow.pop %v3225
      %v3227 = vadd.f32 %v3226, 1.0
      %v3228 = vrcp.pop %v3227
      %v3229 = vmul.f32 %v3227, %v3228
      %v3230 = vsub.f32 1.0, %v3229
      %v3231 = vmul.f32 %v3228, %v3230
      %v3232 = vadd.f32 %v3228, %v3231
      %vm3233 = vweird.f32 %v3227
      %vm3234 = vweird.f32 %v3228
      %vm3235 = vmor %vm3233, %vm3234
      %v3236 = vsel %vm3235, %v3228, %v3232
      %v3237 = vand.u32 2147483647, %v3227
      %vm3238 = vcmp.eq.f32.partialorder %v3237, 8.507059e+37
      %v3239 = vand.u32 %v3227, 2147483648
      %v3240 = vor.u32 1.1754944e-38, %v3239
      %v3241 = vsel %vm3238, %v3240, %v3236
      %v3242 = vmul.f32 1.0, %v3241
      %3244 = vrot.lane.b32.xlu0 %v3242, 64
      %v3245 = vpop.permute.xlu0 %3244
      %v3247 = vsel %vm633, %v3242, %v3245
      %v3248 = vld [vmem:[%s266] sm:$0xff]
      %v3249 = vld [vmem:[%s266 + $0x8] sm:$0xff]
      %v3250 = vld [vmem:[%s266 + $0x10] sm:$0xff]
      %v3251 = vld [vmem:[%s266 + $0x18] sm:$0xff]
      %v3252 = vld [vmem:[%s266 + $0x20] sm:$0xff]
      %v3253 = vld [vmem:[%s266 + $0x28] sm:$0xff]
      %v3254 = vld [vmem:[%s266 + $0x30] sm:$0xff]
      %v3255 = vld [vmem:[%s266 + $0x38] sm:$0xff]
      %v3256 = vld [vmem:[%s266 + $0x40] sm:$0xff]
      %v3257 = vld [vmem:[%s266 + $0x48] sm:$0xff]
      %v3258 = vld [vmem:[%s266 + $0x50] sm:$0xff]
      %v3259 = vld [vmem:[%s266 + $0x58] sm:$0xff]
      %v3260 = vld [vmem:[%s266 + $0x60] sm:$0xff]
      %v3261 = vld [vmem:[%s266 + $0x68] sm:$0xff]
      %v3262 = vld [vmem:[%s266 + $0x70] sm:$0xff]
      %v3263 = vld [vmem:[%s266 + $0x78] sm:$0xff]
      %v3264 = vperm.slane %v3247, 0
      %v3265 = vmul.f32 %v3248, %v3264
      %v3266 = vmul.f32 %v3249, %v3264
      %v3267 = vmul.f32 %v3250, %v3264
      %v3268 = vmul.f32 %v3251, %v3264
      %v3269 = vmul.f32 %v3252, %v3264
      %v3270 = vmul.f32 %v3253, %v3264
      %v3271 = vmul.f32 %v3254, %v3264
      %v3272 = vmul.f32 %v3255, %v3264
      %v3273 = vmul.f32 %v3256, %v3264
      %v3274 = vmul.f32 %v3257, %v3264
      %v3275 = vmul.f32 %v3258, %v3264
      %v3276 = vmul.f32 %v3259, %v3264
      %v3277 = vmul.f32 %v3260, %v3264
      %v3278 = vmul.f32 %v3261, %v3264
      %v3279 = vmul.f32 %v3262, %v3264
      %v3280 = vmul.f32 %v3263, %v3264
      %3281 = vst [vmem:[%s271] sm:$0xff] %v3265
      %3282 = vst [vmem:[%s271 + $0x8] sm:$0xff] %v3266
      %3283 = vst [vmem:[%s271 + $0x10] sm:$0xff] %v3267
      %3284 = vst [vmem:[%s271 + $0x18] sm:$0xff] %v3268
      %3285 = vst [vmem:[%s271 + $0x20] sm:$0xff] %v3269
      %3286 = vst [vmem:[%s271 + $0x28] sm:$0xff] %v3270
      %3287 = vst [vmem:[%s271 + $0x30] sm:$0xff] %v3271
      %3288 = vst [vmem:[%s271 + $0x38] sm:$0xff] %v3272
      %3289 = vst [vmem:[%s271 + $0x40] sm:$0xff] %v3273
      %3290 = vst [vmem:[%s271 + $0x48] sm:$0xff] %v3274
      %3291 = vst [vmem:[%s271 + $0x50] sm:$0xff] %v3275
      %3292 = vst [vmem:[%s271 + $0x58] sm:$0xff] %v3276
      %3293 = vst [vmem:[%s271 + $0x60] sm:$0xff] %v3277
      %3294 = vst [vmem:[%s271 + $0x68] sm:$0xff] %v3278
      %3295 = vst [vmem:[%s271 + $0x70] sm:$0xff] %v3279
      %3296 = vst [vmem:[%s271 + $0x78] sm:$0xff] %v3280
      %p3297 = scmp.lt.s32.totalorder %s17, 1
      %s3298 = scalar_select %p3297, %s17, 1
      %s3299 = smul.addr %s3298, 16
      %s3300 = smul.addr %s3299, 8
      %s3301 = scalar_lea.vmem %s6, %s3300
      // Predicated region
      $region45: #{learned_conv_c.1} parent=43 // pred_check
        %p3302 = pneg %p171
      $region46: #{learned_conv_c.1} parent=43 // pred_check_branch
        %3304 = sbr.rel (%p3302) target = $region48
      $region47: #{learned_conv_c.1} parent=43 // pred_region
        _
      $region48: #{learned_conv_c.1} parent=43 // pred_fallthru
        _
    $region44: #{learned_conv_c.1} parent=5 // pred_fallthru
      _
    %p3305 = scmp.le.s32.totalorder 2, %s12
    // Predicated region
    $region49: #{learned_conv_c.1} parent=5 // pred_check
      %p3306 = pneg %p3305
    $region50: #{learned_conv_c.1} parent=5 // pred_check_branch
      %3308 = sbr.rel (%p3306) target = $region52
    $region51: #{learned_conv_c.1} parent=5 // pred_region
      %s3309 = ssub.s32 %s12, 2
      // Predicated region
      $region53: #{learned_conv_c.1} parent=51 // pred_check
        %p3310 = pneg %p177
      $region54: #{learned_conv_c.1} parent=51 // pred_check_branch
        %3312 = sbr.rel (%p3310) target = $region56
      $region55: #{learned_conv_c.1} parent=51 // pred_region
        %p3313 = scmp.lt.s32.totalorder %s18, 1
        %s3314 = scalar_select %p3313, %s18, 1
        %s3315 = smul.addr %s3314, 16
        %s3316 = smul.addr %s3315, 8
        %s3317 = scalar_lea.vmem %s6, %s3316
      $region56: #{learned_conv_c.1} parent=51 // pred_fallthru
        _
    $region52: #{learned_conv_c.1} parent=5 // pred_fallthru
      _
  $region6: #{learned_conv_c.1} parent=0 // loop_footer
    %s16 = sadd.s32 1, %s12
  $region7: #{learned_conv_c.1} parent=0 // loop_footer_branch
    %11 = sbr.rel target = $region3
  $region8: #{learned_conv_c.1} parent=0 // loop_exit
    _

</llo_original>
